<compile_context>
chip_gen: v6e
topology: v6e:2x2x1
jax: 0.10.0
libtpu: 0.0.40
codegen_flags: <defaults>
</compile_context>

<pallas_src>
import jax
import jax.numpy as jnp
from jax.experimental import pallas as pl
from jax.experimental.pallas import tpu as pltpu


def _round_up(x, m):
    return (x + m - 1) // m * m


def critic_kernel(x_ref, w1_ref, b1_ref, w2t_ref, b2_ref, o_ref):
    # fc1 on the MXU: (TB, D) @ (D, H), f32 accumulation.
    h = jnp.dot(x_ref[...], w1_ref[...], preferred_element_type=jnp.float32)
    # Epilogue entirely in f32 (VPU / EUP): bias + ReLU.
    h = jnp.maximum(h + b1_ref[...], 0.0)
    # fc2 as VPU multiply + lane reduction (avoids an N=1 MXU matmul).
    y = jnp.sum(h * w2t_ref[...], axis=-1, keepdims=True) + b2_ref[0]
    o_ref[...] = jax.nn.sigmoid(y).astype(o_ref.dtype)


def critic_forward(x, w1, b1, w2, b2, *, block_b=512, use_bf16=False):
    """Forward pass of Critic.

    x : (B, D) f32
    w1: (D, H) f32   (transposed vs. PyTorch's fc1.weight (H, D))
    b1: (H,)   f32
    w2: (H, 1) f32   (transposed vs. PyTorch's fc2.weight (1, H))
    b2: (1,)   f32
    returns (B, 1) f32 == sigmoid(relu(x @ w1 + b1) @ w2 + b2)
    """
    B, D = x.shape
    H = w1.shape[1]

    # ---- lane alignment: pad D and H up to multiples of 128 (exact math). ----
    Dp = _round_up(D, 128)
    Hp = _round_up(H, 128)
    if Dp != D:
        x = jnp.pad(x, ((0, 0), (0, Dp - D)))
        w1 = jnp.pad(w1, ((0, Dp - D), (0, 0)))
    if Hp != H:
        w1 = jnp.pad(w1, ((0, 0), (0, Hp - H)))
        b1 = jnp.pad(b1, (0, Hp - H))
        w2 = jnp.pad(w2, ((0, Hp - H), (0, 0)))

    # ---- batch tiling (multiple of 8 sublanes). ----
    TB = min(block_b, _round_up(B, 8))
    TB = _round_up(TB, 8)

    # Keep the double-buffered x tile within a conservative per-buffer VMEM
    # budget (v7x has only 64 MiB VMEM per TC; scoped default is lower).
    mxu_dtype = jnp.bfloat16 if use_bf16 else jnp.float32
    bytes_per = jnp.dtype(mxu_dtype).itemsize
    max_tile_bytes = 16 * 1024 * 1024
    max_tb = max(8, (max_tile_bytes // (Dp * bytes_per)) // 8 * 8)
    TB = min(TB, max_tb)

    Bp = _round_up(B, TB)
    if Bp != B:
        x = jnp.pad(x, ((0, Bp - B), (0, 0)))
    n_tiles = Bp // TB

    # ---- dtypes: bf16 only feeds the MXU; epilogue operands stay f32. ----
    x_in = x.astype(mxu_dtype)
    w1_in = w1.astype(mxu_dtype)
    b1_2d = b1.reshape(1, Hp).astype(jnp.float32)
    w2t = w2.reshape(1, Hp).astype(jnp.float32)   # (H,1) column -> (1,H) row
    b2_s = b2.reshape(1).astype(jnp.float32)

    out = pl.pallas_call(
        critic_kernel,
        out_shape=jax.ShapeDtypeStruct((Bp, 1), jnp.float32),
        grid=(n_tiles,),
        in_specs=[
            pl.BlockSpec((TB, Dp), lambda i: (i, 0)),               # x, tiled
            pl.BlockSpec((Dp, Hp), lambda i: (0, 0)),               # w1, resident
            pl.BlockSpec((1, Hp), lambda i: (0, 0)),                # b1, resident
            pl.BlockSpec((1, Hp), lambda i: (0, 0)),                # w2^T, resident
            pl.BlockSpec(memory_space=pltpu.MemorySpace.SMEM),      # b2 scalar
        ],
        out_specs=pl.BlockSpec((TB, 1), lambda i: (i, 0)),
        compiler_params=pltpu.CompilerParams(
            dimension_semantics=("parallel",),
        ),
    )(x_in, w1_in, b1_2d, w2t, b2_s)

    return out[:B]


def init_params(key, input_size, hidden_size):
    """nn.Linear-style init; weights stored already transposed (in, out)."""
    k1, k2, k3, k4 = jax.random.split(key, 4)
    lim1 = 1.0 / jnp.sqrt(input_size)
    lim2 = 1.0 / jnp.sqrt(hidden_size)
    w1 = jax.random.uniform(k1, (input_size, hidden_size), jnp.float32, -lim1, lim1)
    b1 = jax.random.uniform(k2, (hidden_size,), jnp.float32, -lim1, lim1)
    w2 = jax.random.uniform(k3, (hidden_size, 1), jnp.float32, -lim2, lim2)
    b2 = jax.random.uniform(k4, (1,), jnp.float32, -lim2, lim2)
    return w1, b1, w2, b2


def _reference(x, w1, b1, w2, b2):
    hp = jax.lax.Precision.HIGHEST
    h = jnp.maximum(jnp.dot(x, w1, precision=hp) + b1, 0.0)
    return jax.nn.sigmoid(jnp.dot(h, w2, precision=hp) + b2)


if __name__ == "__main__":
    key = jax.random.PRNGKey(0)
    kx, kp, kx2, kp2 = jax.random.split(key, 4)

    # --- main config: lane-aligned shapes, multi-step batch grid ---
    batch, input_size, hidden_size = 1024, 128, 256
    x = jax.random.normal(kx, (batch, input_size), dtype=jnp.float32)
    w1, b1, w2, b2 = init_params(kp, input_size, hidden_size)
    ref = _reference(x, w1, b1, w2, b2)

    # f32 MXU path (tight tolerance)
    out_f32 = jax.block_until_ready(
        critic_forward(x, w1, b1, w2, b2, block_b=512, use_bf16=False))
    assert out_f32.shape == (batch, 1)
    assert jnp.allclose(out_f32, ref, atol=2e-5, rtol=2e-5)

    # bf16-fed MXU path (f32 accumulation; looser tolerance)
    out_bf16 = jax.block_until_ready(
        critic_forward(x, w1, b1, w2, b2, block_b=512, use_bf16=True))
    assert jnp.allclose(out_bf16, ref, atol=2e-2, rtol=2e-2)

    # --- misaligned config: exercises the padding path ---
    b2_, d2_, h2_ = 37, 100, 96
    x2 = jax.random.normal(kx2, (b2_, d2_), dtype=jnp.float32)
    p2 = init_params(kp2, d2_, h2_)
    out2 = jax.block_until_ready(critic_forward(x2, *p2, use_bf16=False))
    ref2 = _reference(x2, *p2)
    assert out2.shape == (b2_, 1)
    assert jnp.allclose(out2, ref2, atol=2e-5, rtol=2e-5)

    print("KERNEL_OK")
</pallas_src>

<mosaic_0001>
module attributes {stable_mosaic.version = 11 : i64} {
  func.func @critic_kernel(%arg0: i32, %arg1: memref<512x128xf32, #tpu.memory_space<vmem>>, %arg2: memref<128x256xf32, #tpu.memory_space<vmem>>, %arg3: memref<1x256xf32, #tpu.memory_space<vmem>>, %arg4: memref<1x256xf32, #tpu.memory_space<vmem>>, %arg5: memref<1xf32, #tpu.memory_space<smem>>, %arg6: memref<512x1xf32, #tpu.memory_space<vmem>>) attributes {dimension_semantics = [#tpu.dimension_semantics<parallel>], iteration_bounds = array<i64: 2>, scalar_prefetch = 0 : i64, scratch_operands = 0 : i64, tpu.core_type = #tpu.core_type<tc>, window_params = [{transform_indices = @transform_0, window_bounds = array<i64: 512, 128>}, {pipeline_mode = #tpu.pipeline_mode<synchronous>, transform_indices = @transform_1, window_bounds = array<i64: 128, 256>}, {pipeline_mode = #tpu.pipeline_mode<synchronous>, transform_indices = @transform_2, window_bounds = array<i64: 1, 256>}, {pipeline_mode = #tpu.pipeline_mode<synchronous>, transform_indices = @transform_3, window_bounds = array<i64: 1, 256>}, {transform_indices = @transform_4, window_bounds = array<i64: 1>}, {transform_indices = @transform_5, window_bounds = array<i64: 512, 1>}]} {
    %c0 = arith.constant 0 : index
    %c0_0 = arith.constant 0 : index
    %0 = vector.load %arg1[%c0, %c0_0] : memref<512x128xf32, #tpu.memory_space<vmem>>, vector<512x128xf32>
    %c0_1 = arith.constant 0 : index
    %c0_2 = arith.constant 0 : index
    %1 = vector.load %arg2[%c0_1, %c0_2] : memref<128x256xf32, #tpu.memory_space<vmem>>, vector<128x256xf32>
    %cst = arith.constant dense<0.000000e+00> : vector<512x256xf32>
    %2 = tpu.matmul %0, %1, %cst {dimension_numbers = #tpu.dot_dimension_numbers<[1], [0], [0], [1], [0, 0, 1, 1], [], []>} : vector<512x128xf32>, vector<128x256xf32>, vector<512x256xf32> -> vector<512x256xf32>
    %c0_3 = arith.constant 0 : index
    %c0_4 = arith.constant 0 : index
    %3 = vector.load %arg3[%c0_3, %c0_4] : memref<1x256xf32, #tpu.memory_space<vmem>>, vector<1x256xf32>
    %4 = vector.broadcast %3 : vector<1x256xf32> to vector<512x256xf32>
    %5 = arith.addf %2, %4 : vector<512x256xf32>
    %cst_5 = arith.constant 0.000000e+00 : f32
    %6 = vector.broadcast %cst_5 : f32 to vector<512x256xf32>
    %7 = arith.maximumf %5, %6 : vector<512x256xf32>
    %c0_6 = arith.constant 0 : index
    %c0_7 = arith.constant 0 : index
    %8 = vector.load %arg4[%c0_6, %c0_7] : memref<1x256xf32, #tpu.memory_space<vmem>>, vector<1x256xf32>
    %9 = vector.broadcast %8 : vector<1x256xf32> to vector<512x256xf32>
    %10 = arith.mulf %7, %9 : vector<512x256xf32>
    %cst_8 = arith.constant dense<0.000000e+00> : vector<512xf32>
    %11 = vector.multi_reduction <add>, %10, %cst_8 [1] : vector<512x256xf32> to vector<512xf32>
    %12 = vector.shape_cast %11 : vector<512xf32> to vector<512x1xf32>
    %c0_9 = arith.constant 0 : index
    %13 = memref.load %arg5[%c0_9] : memref<1xf32, #tpu.memory_space<smem>>
    %14 = vector.broadcast %13 : f32 to vector<512x1xf32>
    %15 = arith.addf %12, %14 : vector<512x1xf32>
    %16 = arith.negf %15 : vector<512x1xf32>
    %17 = math.exp %16 : vector<512x1xf32>
    %cst_10 = arith.constant 1.000000e+00 : f32
    %18 = vector.broadcast %cst_10 : f32 to vector<512x1xf32>
    %19 = arith.addf %18, %17 : vector<512x1xf32>
    %20 = arith.divf %18, %19 : vector<512x1xf32>
    %c0_11 = arith.constant 0 : index
    %c0_12 = arith.constant 0 : index
    %21 = vector.load %arg6[%c0_11, %c0_12] : memref<512x1xf32, #tpu.memory_space<vmem>>, vector<512x1xf32>
    tpu.vector_store %arg6[%c0_11, %c0_12], %20 {strides = array<i32>} : memref<512x1xf32, #tpu.memory_space<vmem>>, vector<512x1xf32>,
    return
  }
  func.func @transform_0(%arg0: i32) -> (i32, i32) {
    %c0_i32 = arith.constant 0 : i32
    %c0_i32_0 = arith.constant 0 : i32
    return %arg0, %c0_i32 : i32, i32
  }
  func.func @transform_1(%arg0: i32) -> (i32, i32) {
    %c0_i32 = arith.constant 0 : i32
    %c0_i32_0 = arith.constant 0 : i32
    %c0_i32_1 = arith.constant 0 : i32
    return %c0_i32, %c0_i32_0 : i32, i32
  }
  func.func @transform_2(%arg0: i32) -> (i32, i32) {
    %c0_i32 = arith.constant 0 : i32
    %c0_i32_0 = arith.constant 0 : i32
    %c0_i32_1 = arith.constant 0 : i32
    return %c0_i32, %c0_i32_0 : i32, i32
  }
  func.func @transform_3(%arg0: i32) -> (i32, i32) {
    %c0_i32 = arith.constant 0 : i32
    %c0_i32_0 = arith.constant 0 : i32
    %c0_i32_1 = arith.constant 0 : i32
    return %c0_i32, %c0_i32_0 : i32, i32
  }
  func.func @transform_4(%arg0: i32) -> i32 {
    %c0_i32 = arith.constant 0 : i32
    %c0_i32_0 = arith.constant 0 : i32
    return %c0_i32 : i32
  }
  func.func @transform_5(%arg0: i32) -> (i32, i32) {
    %c0_i32 = arith.constant 0 : i32
    %c0_i32_0 = arith.constant 0 : i32
    return %arg0, %c0_i32 : i32, i32
  }
}

</mosaic_0001>

<llo_original>
// kernel: tpu_custom_call.1
$region0: #{tpu_custom_call.1}
  #allocation0 [shape = 'u32[]', space=smem, size = 0x4, offset = 0x4, fixed_abs, tag = 'smem constant byte address 0x4 - core index']
  #allocation1 [shape = 'u32[144,128]{1,0:T(1,128)}', space=vmem, size = 0x12000, scoped, tag = 'internal scratch']
  #allocation2 [shape = 'f32[1]{0:T(128)S(6)}', space=smem, size = 0x200, scoped, tag = 'scoped memory for tpu_custom_call.1']
  %s0 = inlined_call_operand.hbm [shape: f32[1024,128], index: 0, kind: input, shape index: {}]
  %s1 = inlined_call_operand.hbm [shape: f32[128,256], index: 1, kind: input, shape index: {}]
  %s2 = inlined_call_operand.vmem [shape: f32[1,256], index: 2, kind: input, shape index: {}]
  %s3 = inlined_call_operand.vmem [shape: f32[1,256], index: 3, kind: input, shape index: {}]
  %s4 = inlined_call_operand.<no memory space> [shape: f32[1], index: 4, kind: input, shape index: {}]
  %s5 = inlined_call_operand.vmem [shape: f32[1024,1], index: 5, kind: output, shape index: {}]
  %s6 = sld [smem:[#allocation0]]
  $region61: #{tpu_custom_call.1} parent=0
    _
  %s8 = ssub.s32 1, %s6
  %s9 = scalar_select 0, %s8, %s6
  %10 = sst [smem:[#allocation2]] %s4
  $region1: #{tpu_custom_call.1} parent=0
    #allocation3 [shape = 'u8[524288]{0}', space=vmem, size = 0x80000, scoped, tag = 'input window, operand 0']
    #allocation4 [shape = 's32[2]{0}', space=sflag, size = 0x8, scoped, tag = 'scoped memory for tpu_custom_call.1']
    #allocation5 [shape = 'u8[131072]{0}', space=vmem, size = 0x20000, scoped, tag = 'input window, operand 1, single buffered']
    #allocation6 [shape = 's32[1]{0}', space=sflag, size = 0x4, scoped, tag = 'scoped memory for tpu_custom_call.1']
    %11 = vsyncpa [#allocation4], 0
    %s12 = scalar_lea.sflag [#allocation4], 1
    %13 = vsyncpa %s12, 0
    %14 = vsyncpa [#allocation6], 0
    loop: start=0, step=1, limit=4
    $region2: #{tpu_custom_call.1} parent=1 // loop_pre_header
      _
    $region3: #{tpu_custom_call.1} parent=1 // loop_header
      %s16 = sphi 0, %s20
      %p17 = scmp.ge.s32.totalorder %s16, 4
      %s26 = sphi 0, %s28
      %s29 = sphi 0, %s26
      %s30 = sphi 0, %s29
      %s46 = sphi 0, %s30
      %s50 = sphi 0, %s50
      %s52 = sphi 0, %s50
      %s53 = sphi 0, %s52
      %s67 = sphi 0, %s53
      %s71 = sphi 0, %s71
      %s73 = sphi 0, %s71
      %s74 = sphi 0, %s73
      %s88 = sphi 0, %s74
      %s92 = sphi 0, %s92
      %s94 = sphi 0, %s92
      %s95 = sphi 0, %s94
      %s109 = sphi 0, %s95
      %s113 = sphi 0, %s113
      %s115 = sphi 0, %s113
      %s116 = sphi 0, %s115
      %s130 = sphi 0, %s116
      %s136 = sphi 0, %s138
      %s139 = sphi 0, %s136
      %s140 = sphi 0, %s139
      %s156 = sphi 0, %s140
    $region4: #{tpu_custom_call.1} parent=1 // loop_header_branch
      %19 = sbr.rel (%p17) target = $region8
    $region5: #{tpu_custom_call.1} parent=1 // loop_body
      %s21 = ssub.s32 %s16, 1
      %s22 = ssub.s32 %s16, 2
      %s23 = sadd.s32 %s16, 1
      %s24 = ssub.s32 %s16, %s23
      %p25 = scmp.eq.s32.totalorder %s24, 0
      %s27 = sadd.s32 %s26, 1
      %s28 = scalar_select %p25, %s26, %s27
      %p31 = pneg %p25
      %p32 = scmp.eq.s32.totalorder %s16, 1
      %p33 = por %p31, %p32
      %p34 = scmp.ne.s32.totalorder %s26, %s29
      %p35 = scmp.eq.s32.totalorder %s16, 0
      %p36 = por %p34, %p35
      %p37 = scmp.ne.s32.totalorder %s26, %s29
      %p38 = scmp.eq.s32.totalorder %s21, 1
      %p39 = por %p37, %p38
      %p40 = scmp.ne.s32.totalorder %s29, %s30
      %p41 = scmp.eq.s32.totalorder %s21, 0
      %p42 = por %p40, %p41
      %p43 = scmp.ne.s32.totalorder %s29, %s30
      %p44 = scmp.eq.s32.totalorder %s22, 1
      %p45 = por %p43, %p44
      %p47 = scmp.ne.s32.totalorder %s30, %s46
      %p48 = scmp.eq.s32.totalorder %s22, 0
      %p49 = por %p47, %p48
      %s51 = sadd.s32 %s50, 1
      %p54 = scmp.eq.s32.totalorder %s16, 1
      %p55 = scmp.ne.s32.totalorder %s50, %s52
      %p56 = scmp.eq.s32.totalorder %s16, 0
      %p57 = por %p55, %p56
      %p58 = scmp.ne.s32.totalorder %s50, %s52
      %p59 = scmp.eq.s32.totalorder %s21, 1
      %p60 = por %p58, %p59
      %p61 = scmp.ne.s32.totalorder %s52, %s53
      %p62 = scmp.eq.s32.totalorder %s21, 0
      %p63 = por %p61, %p62
      %p64 = scmp.ne.s32.totalorder %s52, %s53
      %p65 = scmp.eq.s32.totalorder %s22, 1
      %p66 = por %p64, %p65
      %p68 = scmp.ne.s32.totalorder %s53, %s67
      %p69 = scmp.eq.s32.totalorder %s22, 0
      %p70 = por %p68, %p69
      %s72 = sadd.s32 %s71, 1
      %p75 = scmp.eq.s32.totalorder %s16, 1
      %p76 = scmp.ne.s32.totalorder %s71, %s73
      %p77 = scmp.eq.s32.totalorder %s16, 0
      %p78 = por %p76, %p77
      %p79 = scmp.ne.s32.totalorder %s71, %s73
      %p80 = scmp.eq.s32.totalorder %s21, 1
      %p81 = por %p79, %p80
      %p82 = scmp.ne.s32.totalorder %s73, %s74
      %p83 = scmp.eq.s32.totalorder %s21, 0
      %p84 = por %p82, %p83
      %p85 = scmp.ne.s32.totalorder %s73, %s74
      %p86 = scmp.eq.s32.totalorder %s22, 1
      %p87 = por %p85, %p86
      %p89 = scmp.ne.s32.totalorder %s74, %s88
      %p90 = scmp.eq.s32.totalorder %s22, 0
      %p91 = por %p89, %p90
      %s93 = sadd.s32 %s92, 1
      %p96 = scmp.eq.s32.totalorder %s16, 1
      %p97 = scmp.ne.s32.totalorder %s92, %s94
      %p98 = scmp.eq.s32.totalorder %s16, 0
      %p99 = por %p97, %p98
      %p100 = scmp.ne.s32.totalorder %s92, %s94
      %p101 = scmp.eq.s32.totalorder %s21, 1
      %p102 = por %p100, %p101
      %p103 = scmp.ne.s32.totalorder %s94, %s95
      %p104 = scmp.eq.s32.totalorder %s21, 0
      %p105 = por %p103, %p104
      %p106 = scmp.ne.s32.totalorder %s94, %s95
      %p107 = scmp.eq.s32.totalorder %s22, 1
      %p108 = por %p106, %p107
      %p110 = scmp.ne.s32.totalorder %s95, %s109
      %p111 = scmp.eq.s32.totalorder %s22, 0
      %p112 = por %p110, %p111
      %s114 = sadd.s32 %s113, 1
      %p117 = scmp.eq.s32.totalorder %s16, 1
      %p118 = scmp.ne.s32.totalorder %s113, %s115
      %p119 = scmp.eq.s32.totalorder %s16, 0
      %p120 = por %p118, %p119
      %p121 = scmp.ne.s32.totalorder %s113, %s115
      %p122 = scmp.eq.s32.totalorder %s21, 1
      %p123 = por %p121, %p122
      %p124 = scmp.ne.s32.totalorder %s115, %s116
      %p125 = scmp.eq.s32.totalorder %s21, 0
      %p126 = por %p124, %p125
      %p127 = scmp.ne.s32.totalorder %s115, %s116
      %p128 = scmp.eq.s32.totalorder %s22, 1
      %p129 = por %p127, %p128
      %p131 = scmp.ne.s32.totalorder %s116, %s130
      %p132 = scmp.eq.s32.totalorder %s22, 0
      %p133 = por %p131, %p132
      %s134 = ssub.s32 %s16, %s23
      %p135 = scmp.eq.s32.totalorder %s134, 0
      %s137 = sadd.s32 %s136, 1
      %s138 = scalar_select %p135, %s136, %s137
      %p141 = pneg %p135
      %p142 = scmp.eq.s32.totalorder %s16, 1
      %p143 = por %p141, %p142
      %p144 = scmp.ne.s32.totalorder %s136, %s139
      %p145 = scmp.eq.s32.totalorder %s16, 0
      %p146 = por %p144, %p145
      %p147 = scmp.ne.s32.totalorder %s136, %s139
      %p148 = scmp.eq.s32.totalorder %s21, 1
      %p149 = por %p147, %p148
      %p150 = scmp.ne.s32.totalorder %s139, %s140
      %p151 = scmp.eq.s32.totalorder %s21, 0
      %p152 = por %p150, %p151
      %p153 = scmp.ne.s32.totalorder %s139, %s140
      %p154 = scmp.eq.s32.totalorder %s22, 1
      %p155 = por %p153, %p154
      %p157 = scmp.ne.s32.totalorder %s140, %s156
      %p158 = scmp.eq.s32.totalorder %s22, 0
      %p159 = por %p157, %p158
      %p160 = scmp.le.s32.totalorder 1, %s16
      %p161 = scmp.lt.s32.totalorder %s16, 3
      %p162 = pnand %p160, %p161
      %p163 = pneg %p162
      // Predicated region
      $region9: #{tpu_custom_call.1} parent=5 // pred_check
        _
      $region10: #{tpu_custom_call.1} parent=5 // pred_check_branch
        %165 = sbr.rel (%p162) target = $region12
      $region11: #{tpu_custom_call.1} parent=5 // pred_region
        %s166 = ssub.s32 %s16, 1
        // Predicated region
        $region13: #{tpu_custom_call.1} parent=11 // pred_check
          %p167 = pneg %p63
        $region14: #{tpu_custom_call.1} parent=11 // pred_check_branch
          %169 = sbr.rel (%p167) target = $region16
        $region15: #{tpu_custom_call.1} parent=11 // pred_region
          %s171 = ssub.s32 4096, 4096
          %172 = vsyncadd [#allocation6], %s171
          %s173 = sshll.u32 [#allocation5], 4
          %s174 = int_to_ptr.vmem [resolvable:$true] %s173
          %179 = dma.hbm_to_vmem [thread:$0]  %s1, 4096, %s174, [#allocation6], 256, 256, 16
        $region16: #{tpu_custom_call.1} parent=11 // pred_fallthru
          _
        // Predicated region
        $region17: #{tpu_custom_call.1} parent=11 // pred_check
          %p180 = pneg %p84
        $region18: #{tpu_custom_call.1} parent=11 // pred_check_branch
          %182 = sbr.rel (%p180) target = $region20
        $region19: #{tpu_custom_call.1} parent=11 // pred_region
          _
        $region20: #{tpu_custom_call.1} parent=11 // pred_fallthru
          _
        // Predicated region
        $region21: #{tpu_custom_call.1} parent=11 // pred_check
          %p183 = pneg %p105
        $region22: #{tpu_custom_call.1} parent=11 // pred_check_branch
          %185 = sbr.rel (%p183) target = $region24
        $region23: #{tpu_custom_call.1} parent=11 // pred_region
          _
        $region24: #{tpu_custom_call.1} parent=11 // pred_fallthru
          _
        // Predicated region
        $region25: #{tpu_custom_call.1} parent=11 // pred_check
          %p186 = pneg %p126
        $region26: #{tpu_custom_call.1} parent=11 // pred_check_branch
          %188 = sbr.rel (%p186) target = $region28
        $region27: #{tpu_custom_call.1} parent=11 // pred_region
          _
        $region28: #{tpu_custom_call.1} parent=11 // pred_fallthru
          _
      $region12: #{tpu_custom_call.1} parent=5 // pred_fallthru
        _
      %p189 = scmp.lt.s32.totalorder %s16, 2
      // Predicated region
      $region29: #{tpu_custom_call.1} parent=5 // pred_check
        %p190 = pneg %p189
      $region30: #{tpu_custom_call.1} parent=5 // pred_check_branch
        %192 = sbr.rel (%p190) target = $region32
      $region31: #{tpu_custom_call.1} parent=5 // pred_region
        // Predicated region
        $region33: #{tpu_custom_call.1} parent=31 // pred_check
          %p193 = pneg %p36
        $region34: #{tpu_custom_call.1} parent=31 // pred_check_branch
          %195 = sbr.rel (%p193) target = $region36
        $region35: #{tpu_custom_call.1} parent=31 // pred_region
          %s196 = sand.u32 %s26, 1
          %s197 = scalar_lea.sflag [#allocation4], %s196
          %s198 = sand.u32 %s26, 1
          %s199 = smul.addr %s198, 512
          %s200 = scalar_lea.vmem [#allocation3], %s199
          %s201 = smul.u32 64, %s16
          %s203 = ssub.s32 8192, 8192
          %204 = vsyncadd %s197, %s203
          %s205 = smul.addr %s201, 128
          %s206 = scalar_lea.hbm %s0, %s205
          %s207 = sshll.u32 %s200, 4
          %s208 = int_to_ptr.vmem [resolvable:$true] %s207
          %213 = dma.hbm_to_vmem [thread:$0]  %s206, 8192, %s208, %s197, 128, 128, 8
        $region36: #{tpu_custom_call.1} parent=31 // pred_fallthru
          _
      $region32: #{tpu_custom_call.1} parent=5 // pred_fallthru
        _
      %p214 = scmp.le.s32.totalorder 1, %s16
      %p215 = scmp.lt.s32.totalorder %s16, 3
      %p216 = pnand %p214, %p215
      %p217 = pneg %p216
      // Predicated region
      $region37: #{tpu_custom_call.1} parent=5 // pred_check
        _
      $region38: #{tpu_custom_call.1} parent=5 // pred_check_branch
        %219 = sbr.rel (%p216) target = $region40
      $region39: #{tpu_custom_call.1} parent=5 // pred_region
        %s220 = ssub.s32 %s16, 1
        %s221 = sand.u32 %s29, 1
        %s222 = scalar_lea.sflag [#allocation4], %s221
        %s223 = sand.u32 %s29, 1
        %s224 = smul.addr %s223, 512
        %s225 = scalar_lea.vmem [#allocation3], %s224
        // Predicated region
        $region41: #{tpu_custom_call.1} parent=39 // pred_check
          %p226 = pneg %p42
        $region42: #{tpu_custom_call.1} parent=39 // pred_check_branch
          %228 = sbr.rel (%p226) target = $region44
        $region43: #{tpu_custom_call.1} parent=39 // pred_region
          %229 = dma.done %s222, 8192
        $region44: #{tpu_custom_call.1} parent=39 // pred_fallthru
          _
        // Predicated region
        $region45: #{tpu_custom_call.1} parent=39 // pred_check
          %p230 = pneg %p63
        $region46: #{tpu_custom_call.1} parent=39 // pred_check_branch
          %232 = sbr.rel (%p230) target = $region48
        $region47: #{tpu_custom_call.1} parent=39 // pred_region
          %233 = dma.done [#allocation6], 4096
        $region48: #{tpu_custom_call.1} parent=39 // pred_fallthru
          _
        %s234 = sand.u32 %s29, 1
        %s235 = scalar_lea.sflag [#allocation4], %s234
        %s236 = sand.u32 %s29, 1
        %s237 = smul.addr %s236, 512
        %s238 = scalar_lea.vmem [#allocation3], %s237
        %p239 = pneg %p42
        %p240 = pneg %p39
        %p241 = pneg %p63
        %p242 = pneg %p60
        %p243 = pneg %p84
        %p244 = pneg %p81
        %p245 = pneg %p105
        %p246 = pneg %p102
        %p247 = pneg %p126
        %p248 = pneg %p123
        %p249 = pneg %p152
        %p250 = pneg %p149
        %s251 = smul.u32 64, %s21
        %p252 = scmp.lt.s32.totalorder %s251, 127
        %s253 = scalar_select %p252, %s251, 127
        %s254 = smul.addr %s253, 8
        %s255 = scalar_lea.vmem %s5, %s254
        %s256 = smul.u32 64, %s21
        %s257 = smul.u32 64, %s21
        %p258 = scmp.lt.s32.totalorder %s257, 127
        %s259 = scalar_select %p258, %s257, 127
        %s260 = smul.addr %s259, 8
        %s261 = scalar_lea.vmem %s5, %s260
        %s262 = smul.u32 64, %s21
        %v263 = vld [vmem:[%s225] sm:$0xff]
        %v264 = vld [vmem:[%s225 + $0x8] sm:$0xff]
        %v265 = vld [vmem:[%s225 + $0x10] sm:$0xff]
        %v266 = vld [vmem:[%s225 + $0x18] sm:$0xff]
        %v267 = vld [vmem:[%s225 + $0x20] sm:$0xff]
        %v268 = vld [vmem:[%s225 + $0x28] sm:$0xff]
        %v269 = vld [vmem:[%s225 + $0x30] sm:$0xff]
        %v270 = vld [vmem:[%s225 + $0x38] sm:$0xff]
        %v271 = vld [vmem:[%s225 + $0x40] sm:$0xff]
        %v272 = vld [vmem:[%s225 + $0x48] sm:$0xff]
        %v273 = vld [vmem:[%s225 + $0x50] sm:$0xff]
        %v274 = vld [vmem:[%s225 + $0x58] sm:$0xff]
        %v275 = vld [vmem:[%s225 + $0x60] sm:$0xff]
        %v276 = vld [vmem:[%s225 + $0x68] sm:$0xff]
        %v277 = vld [vmem:[%s225 + $0x70] sm:$0xff]
        %v278 = vld [vmem:[%s225 + $0x78] sm:$0xff]
        %v279 = vld [vmem:[%s225 + $0x80] sm:$0xff]
        %v280 = vld [vmem:[%s225 + $0x88] sm:$0xff]
        %v281 = vld [vmem:[%s225 + $0x90] sm:$0xff]
        %v282 = vld [vmem:[%s225 + $0x98] sm:$0xff]
        %v283 = vld [vmem:[%s225 + $0xa0] sm:$0xff]
        %v284 = vld [vmem:[%s225 + $0xa8] sm:$0xff]
        %v285 = vld [vmem:[%s225 + $0xb0] sm:$0xff]
        %v286 = vld [vmem:[%s225 + $0xb8] sm:$0xff]
        %v287 = vld [vmem:[%s225 + $0xc0] sm:$0xff]
        %v288 = vld [vmem:[%s225 + $0xc8] sm:$0xff]
        %v289 = vld [vmem:[%s225 + $0xd0] sm:$0xff]
        %v290 = vld [vmem:[%s225 + $0xd8] sm:$0xff]
        %v291 = vld [vmem:[%s225 + $0xe0] sm:$0xff]
        %v292 = vld [vmem:[%s225 + $0xe8] sm:$0xff]
        %v293 = vld [vmem:[%s225 + $0xf0] sm:$0xff]
        %v294 = vld [vmem:[%s225 + $0xf8] sm:$0xff]
        %v295 = vld [vmem:[%s225 + $0x100] sm:$0xff]
        %v296 = vld [vmem:[%s225 + $0x108] sm:$0xff]
        %v297 = vld [vmem:[%s225 + $0x110] sm:$0xff]
        %v298 = vld [vmem:[%s225 + $0x118] sm:$0xff]
        %v299 = vld [vmem:[%s225 + $0x120] sm:$0xff]
        %v300 = vld [vmem:[%s225 + $0x128] sm:$0xff]
        %v301 = vld [vmem:[%s225 + $0x130] sm:$0xff]
        %v302 = vld [vmem:[%s225 + $0x138] sm:$0xff]
        %v303 = vld [vmem:[%s225 + $0x140] sm:$0xff]
        %v304 = vld [vmem:[%s225 + $0x148] sm:$0xff]
        %v305 = vld [vmem:[%s225 + $0x150] sm:$0xff]
        %v306 = vld [vmem:[%s225 + $0x158] sm:$0xff]
        %v307 = vld [vmem:[%s225 + $0x160] sm:$0xff]
        %v308 = vld [vmem:[%s225 + $0x168] sm:$0xff]
        %v309 = vld [vmem:[%s225 + $0x170] sm:$0xff]
        %v310 = vld [vmem:[%s225 + $0x178] sm:$0xff]
        %v311 = vld [vmem:[%s225 + $0x180] sm:$0xff]
        %v312 = vld [vmem:[%s225 + $0x188] sm:$0xff]
        %v313 = vld [vmem:[%s225 + $0x190] sm:$0xff]
        %v314 = vld [vmem:[%s225 + $0x198] sm:$0xff]
        %v315 = vld [vmem:[%s225 + $0x1a0] sm:$0xff]
        %v316 = vld [vmem:[%s225 + $0x1a8] sm:$0xff]
        %v317 = vld [vmem:[%s225 + $0x1b0] sm:$0xff]
        %v318 = vld [vmem:[%s225 + $0x1b8] sm:$0xff]
        %v319 = vld [vmem:[%s225 + $0x1c0] sm:$0xff]
        %v320 = vld [vmem:[%s225 + $0x1c8] sm:$0xff]
        %v321 = vld [vmem:[%s225 + $0x1d0] sm:$0xff]
        %v322 = vld [vmem:[%s225 + $0x1d8] sm:$0xff]
        %v323 = vld [vmem:[%s225 + $0x1e0] sm:$0xff]
        %v324 = vld [vmem:[%s225 + $0x1e8] sm:$0xff]
        %v325 = vld [vmem:[%s225 + $0x1f0] sm:$0xff]
        %v326 = vld [vmem:[%s225 + $0x1f8] sm:$0xff]
        %v327 = vld [vmem:[#allocation5] sm:$0xff]
        %v328 = vld [vmem:[#allocation5 + $0x8] sm:$0xff]
        %v329 = vld [vmem:[#allocation5 + $0x10] sm:$0xff]
        %v330 = vld [vmem:[#allocation5 + $0x18] sm:$0xff]
        %v331 = vld [vmem:[#allocation5 + $0x20] sm:$0xff]
        %v332 = vld [vmem:[#allocation5 + $0x28] sm:$0xff]
        %v333 = vld [vmem:[#allocation5 + $0x30] sm:$0xff]
        %v334 = vld [vmem:[#allocation5 + $0x38] sm:$0xff]
        %v335 = vld [vmem:[#allocation5 + $0x40] sm:$0xff]
        %v336 = vld [vmem:[#allocation5 + $0x48] sm:$0xff]
        %v337 = vld [vmem:[#allocation5 + $0x50] sm:$0xff]
        %v338 = vld [vmem:[#allocation5 + $0x58] sm:$0xff]
        %v339 = vld [vmem:[#allocation5 + $0x60] sm:$0xff]
        %v340 = vld [vmem:[#allocation5 + $0x68] sm:$0xff]
        %v341 = vld [vmem:[#allocation5 + $0x70] sm:$0xff]
        %v342 = vld [vmem:[#allocation5 + $0x78] sm:$0xff]
        %v343 = vld [vmem:[#allocation5 + $0x80] sm:$0xff]
        %v344 = vld [vmem:[#allocation5 + $0x88] sm:$0xff]
        %v345 = vld [vmem:[#allocation5 + $0x90] sm:$0xff]
        %v346 = vld [vmem:[#allocation5 + $0x98] sm:$0xff]
        %v347 = vld [vmem:[#allocation5 + $0xa0] sm:$0xff]
        %v348 = vld [vmem:[#allocation5 + $0xa8] sm:$0xff]
        %v349 = vld [vmem:[#allocation5 + $0xb0] sm:$0xff]
        %v350 = vld [vmem:[#allocation5 + $0xb8] sm:$0xff]
        %v351 = vld [vmem:[#allocation5 + $0xc0] sm:$0xff]
        %v352 = vld [vmem:[#allocation5 + $0xc8] sm:$0xff]
        %v353 = vld [vmem:[#allocation5 + $0xd0] sm:$0xff]
        %v354 = vld [vmem:[#allocation5 + $0xd8] sm:$0xff]
        %v355 = vld [vmem:[#allocation5 + $0xe0] sm:$0xff]
        %v356 = vld [vmem:[#allocation5 + $0xe8] sm:$0xff]
        %v357 = vld [vmem:[#allocation5 + $0xf0] sm:$0xff]
        %v358 = vld [vmem:[#allocation5 + $0xf8] sm:$0xff]
        %v359 = vld [vmem:[%s2] sm:$0x3]
        %v361 = vlaneseq
        %v362 = vshrl.u32 %v361, 7
        %v363 = vsub.s32 0, %v362
        %v364 = vrot.slane %v359, %v363
        %v365 = vlaneseq
        %v366 = vshrl.u32 %v365, 7
        %v367 = vsub.s32 1, %v366
        %v368 = vrot.slane %v359, %v367
        %371 = vmatprep.subr.mxu0 %v358
        %372 = vmatpush1.msra.mxu0 %v357
        %373 = vmatprep.subr.mxu0 %v356
        %374 = vmatpush1.msra.mxu0 %v355
        %375 = vmatprep.subr.mxu0 %v354
        %376 = vmatpush1.msra.mxu0 %v353
        %377 = vmatprep.subr.mxu0 %v352
        %378 = vmatpush1.msra.mxu0 %v351
        %379 = vmatprep.subr.mxu0 %v350
        %380 = vmatpush1.msra.mxu0 %v349
        %381 = vmatprep.subr.mxu0 %v348
        %382 = vmatpush1.msra.mxu0 %v347
        %383 = vmatprep.subr.mxu0 %v346
        %384 = vmatpush1.msra.mxu0 %v345
        %385 = vmatprep.subr.mxu0 %v344
        %386 = vmatpush1.msra.mxu0 %v343
        %387 = vmatprep.subr.mxu0 %v342
        %388 = vmatpush1.msra.mxu0 %v341
        %389 = vmatprep.subr.mxu0 %v340
        %390 = vmatpush1.msra.mxu0 %v339
        %391 = vmatprep.subr.mxu0 %v338
        %392 = vmatpush1.msra.mxu0 %v337
        %393 = vmatprep.subr.mxu0 %v336
        %394 = vmatpush1.msra.mxu0 %v335
        %395 = vmatprep.subr.mxu0 %v334
        %396 = vmatpush1.msra.mxu0 %v333
        %397 = vmatprep.subr.mxu0 %v332
        %398 = vmatpush1.msra.mxu0 %v331
        %399 = vmatprep.subr.mxu0 %v330
        %400 = vmatpush1.msra.mxu0 %v329
        %401 = vmatprep.subr.mxu0 %v328
        %402 = vmatpush1.msra.mxu0 %v327
        %403 = vmatprep.subr.mxu0 0.0
        %404 = vmatpush2.msra.mxu0 0.0
        %405 = vmatprep.subr.mxu0 0.0
        %406 = vmatpush2.msra.mxu0 0.0
        %407 = vmatprep.subr.mxu0 0.0
        %408 = vmatpush2.msra.mxu0 0.0
        %409 = vmatprep.subr.mxu0 0.0
        %410 = vmatpush2.msra.mxu0 0.0
        %411 = vmatprep.subr.mxu0 0.0
        %412 = vmatpush2.msra.mxu0 0.0
        %413 = vmatprep.subr.mxu0 0.0
        %414 = vmatpush2.msra.mxu0 0.0
        %415 = vmatprep.subr.mxu0 0.0
        %416 = vmatpush2.msra.mxu0 0.0
        %417 = vmatprep.subr.mxu0 0.0
        %418 = vmatpush2.msra.mxu0 0.0
        %419 = vmatprep.subr.mxu0 0.0
        %420 = vmatpush2.msra.mxu0 0.0
        %421 = vmatprep.subr.mxu0 0.0
        %422 = vmatpush2.msra.mxu0 0.0
        %423 = vmatprep.subr.mxu0 0.0
        %424 = vmatpush2.msra.mxu0 0.0
        %425 = vmatprep.subr.mxu0 0.0
        %426 = vmatpush2.msra.mxu0 0.0
        %427 = vmatprep.subr.mxu0 0.0
        %428 = vmatpush2.msra.mxu0 0.0
        %429 = vmatprep.subr.mxu0 0.0
        %430 = vmatpush2.msra.mxu0 0.0
        %431 = vmatprep.subr.mxu0 0.0
        %432 = vmatpush2.msra.mxu0 0.0
        %433 = vmatprep.subr.mxu0 0.0
        %434 = vmatpush2.msra.mxu0 0.0
        %435 = vmatprep.mubr.f32.mxu0 0.0
        %436 = vmatmul.mubr.f32.gmra.mxu0 %v263
        %v437 = vpop.f32.mrf.mxu0
        %v438 = vadd.f32 %v364, %v437
        %v439 = vpop.f32.mrf.mxu0
        %v440 = vadd.f32 %v368, %v439
        %441 = vmatprep.mubr.f32.mxu0 0.0
        %442 = vmatmul.mubr.f32.gmra.mxu0 %v264
        %v443 = vpop.f32.mrf.mxu0
        %v444 = vadd.f32 %v364, %v443
        %v445 = vpop.f32.mrf.mxu0
        %v446 = vadd.f32 %v368, %v445
        %447 = vmatprep.mubr.f32.mxu0 0.0
        %448 = vmatmul.mubr.f32.gmra.mxu0 %v265
        %v449 = vpop.f32.mrf.mxu0
        %v450 = vadd.f32 %v364, %v449
        %v451 = vpop.f32.mrf.mxu0
        %v452 = vadd.f32 %v368, %v451
        %453 = vmatprep.mubr.f32.mxu0 0.0
        %454 = vmatmul.mubr.f32.gmra.mxu0 %v266
        %v455 = vpop.f32.mrf.mxu0
        %v456 = vadd.f32 %v364, %v455
        %v457 = vpop.f32.mrf.mxu0
        %v458 = vadd.f32 %v368, %v457
        %459 = vmatprep.mubr.f32.mxu0 0.0
        %460 = vmatmul.mubr.f32.gmra.mxu0 %v267
        %v461 = vpop.f32.mrf.mxu0
        %v462 = vadd.f32 %v364, %v461
        %v463 = vpop.f32.mrf.mxu0
        %v464 = vadd.f32 %v368, %v463
        %465 = vmatprep.mubr.f32.mxu0 0.0
        %466 = vmatmul.mubr.f32.gmra.mxu0 %v268
        %v467 = vpop.f32.mrf.mxu0
        %v468 = vadd.f32 %v364, %v467
        %v469 = vpop.f32.mrf.mxu0
        %v470 = vadd.f32 %v368, %v469
        %471 = vmatprep.mubr.f32.mxu0 0.0
        %472 = vmatmul.mubr.f32.gmra.mxu0 %v269
        %v473 = vpop.f32.mrf.mxu0
        %v474 = vadd.f32 %v364, %v473
        %v475 = vpop.f32.mrf.mxu0
        %v476 = vadd.f32 %v368, %v475
        %477 = vmatprep.mubr.f32.mxu0 0.0
        %478 = vmatmul.mubr.f32.gmra.mxu0 %v270
        %v479 = vpop.f32.mrf.mxu0
        %v480 = vadd.f32 %v364, %v479
        %v481 = vpop.f32.mrf.mxu0
        %v482 = vadd.f32 %v368, %v481
        %483 = vmatprep.mubr.f32.mxu0 0.0
        %484 = vmatmul.mubr.f32.gmra.mxu0 %v271
        %v485 = vpop.f32.mrf.mxu0
        %v486 = vadd.f32 %v364, %v485
        %v487 = vpop.f32.mrf.mxu0
        %v488 = vadd.f32 %v368, %v487
        %489 = vmatprep.mubr.f32.mxu0 0.0
        %490 = vmatmul.mubr.f32.gmra.mxu0 %v272
        %v491 = vpop.f32.mrf.mxu0
        %v492 = vadd.f32 %v364, %v491
        %v493 = vpop.f32.mrf.mxu0
        %v494 = vadd.f32 %v368, %v493
        %495 = vmatprep.mubr.f32.mxu0 0.0
        %496 = vmatmul.mubr.f32.gmra.mxu0 %v273
        %v497 = vpop.f32.mrf.mxu0
        %v498 = vadd.f32 %v364, %v497
        %v499 = vpop.f32.mrf.mxu0
        %v500 = vadd.f32 %v368, %v499
        %501 = vmatprep.mubr.f32.mxu0 0.0
        %502 = vmatmul.mubr.f32.gmra.mxu0 %v274
        %v503 = vpop.f32.mrf.mxu0
        %v504 = vadd.f32 %v364, %v503
        %v505 = vpop.f32.mrf.mxu0
        %v506 = vadd.f32 %v368, %v505
        %507 = vmatprep.mubr.f32.mxu0 0.0
        %508 = vmatmul.mubr.f32.gmra.mxu0 %v275
        %v509 = vpop.f32.mrf.mxu0
        %v510 = vadd.f32 %v364, %v509
        %v511 = vpop.f32.mrf.mxu0
        %v512 = vadd.f32 %v368, %v511
        %513 = vmatprep.mubr.f32.mxu0 0.0
        %514 = vmatmul.mubr.f32.gmra.mxu0 %v276
        %v515 = vpop.f32.mrf.mxu0
        %v516 = vadd.f32 %v364, %v515
        %v517 = vpop.f32.mrf.mxu0
        %v518 = vadd.f32 %v368, %v517
        %519 = vmatprep.mubr.f32.mxu0 0.0
        %520 = vmatmul.mubr.f32.gmra.mxu0 %v277
        %v521 = vpop.f32.mrf.mxu0
        %v522 = vadd.f32 %v364, %v521
        %v523 = vpop.f32.mrf.mxu0
        %v524 = vadd.f32 %v368, %v523
        %525 = vmatprep.mubr.f32.mxu0 0.0
        %526 = vmatmul.mubr.f32.gmra.mxu0 %v278
        %v527 = vpop.f32.mrf.mxu0
        %v528 = vadd.f32 %v364, %v527
        %v529 = vpop.f32.mrf.mxu0
        %v530 = vadd.f32 %v368, %v529
        %531 = vmatprep.mubr.f32.mxu0 0.0
        %532 = vmatmul.mubr.f32.gmra.mxu0 %v279
        %v533 = vpop.f32.mrf.mxu0
        %v534 = vadd.f32 %v364, %v533
        %v535 = vpop.f32.mrf.mxu0
        %v536 = vadd.f32 %v368, %v535
        %537 = vmatprep.mubr.f32.mxu0 0.0
        %538 = vmatmul.mubr.f32.gmra.mxu0 %v280
        %v539 = vpop.f32.mrf.mxu0
        %v540 = vadd.f32 %v364, %v539
        %v541 = vpop.f32.mrf.mxu0
        %v542 = vadd.f32 %v368, %v541
        %543 = vmatprep.mubr.f32.mxu0 0.0
        %544 = vmatmul.mubr.f32.gmra.mxu0 %v281
        %v545 = vpop.f32.mrf.mxu0
        %v546 = vadd.f32 %v364, %v545
        %v547 = vpop.f32.mrf.mxu0
        %v548 = vadd.f32 %v368, %v547
        %549 = vmatprep.mubr.f32.mxu0 0.0
        %550 = vmatmul.mubr.f32.gmra.mxu0 %v282
        %v551 = vpop.f32.mrf.mxu0
        %v552 = vadd.f32 %v364, %v551
        %v553 = vpop.f32.mrf.mxu0
        %v554 = vadd.f32 %v368, %v553
        %555 = vmatprep.mubr.f32.mxu0 0.0
        %556 = vmatmul.mubr.f32.gmra.mxu0 %v283
        %v557 = vpop.f32.mrf.mxu0
        %v558 = vadd.f32 %v364, %v557
        %v559 = vpop.f32.mrf.mxu0
        %v560 = vadd.f32 %v368, %v559
        %561 = vmatprep.mubr.f32.mxu0 0.0
        %562 = vmatmul.mubr.f32.gmra.mxu0 %v284
        %v563 = vpop.f32.mrf.mxu0
        %v564 = vadd.f32 %v364, %v563
        %v565 = vpop.f32.mrf.mxu0
        %v566 = vadd.f32 %v368, %v565
        %567 = vmatprep.mubr.f32.mxu0 0.0
        %568 = vmatmul.mubr.f32.gmra.mxu0 %v285
        %v569 = vpop.f32.mrf.mxu0
        %v570 = vadd.f32 %v364, %v569
        %v571 = vpop.f32.mrf.mxu0
        %v572 = vadd.f32 %v368, %v571
        %573 = vmatprep.mubr.f32.mxu0 0.0
        %574 = vmatmul.mubr.f32.gmra.mxu0 %v286
        %v575 = vpop.f32.mrf.mxu0
        %v576 = vadd.f32 %v364, %v575
        %v577 = vpop.f32.mrf.mxu0
        %v578 = vadd.f32 %v368, %v577
        %579 = vmatprep.mubr.f32.mxu0 0.0
        %580 = vmatmul.mubr.f32.gmra.mxu0 %v287
        %v581 = vpop.f32.mrf.mxu0
        %v582 = vadd.f32 %v364, %v581
        %v583 = vpop.f32.mrf.mxu0
        %v584 = vadd.f32 %v368, %v583
        %585 = vmatprep.mubr.f32.mxu0 0.0
        %586 = vmatmul.mubr.f32.gmra.mxu0 %v288
        %v587 = vpop.f32.mrf.mxu0
        %v588 = vadd.f32 %v364, %v587
        %v589 = vpop.f32.mrf.mxu0
        %v590 = vadd.f32 %v368, %v589
        %591 = vmatprep.mubr.f32.mxu0 0.0
        %592 = vmatmul.mubr.f32.gmra.mxu0 %v289
        %v593 = vpop.f32.mrf.mxu0
        %v594 = vadd.f32 %v364, %v593
        %v595 = vpop.f32.mrf.mxu0
        %v596 = vadd.f32 %v368, %v595
        %597 = vmatprep.mubr.f32.mxu0 0.0
        %598 = vmatmul.mubr.f32.gmra.mxu0 %v290
        %v599 = vpop.f32.mrf.mxu0
        %v600 = vadd.f32 %v364, %v599
        %v601 = vpop.f32.mrf.mxu0
        %v602 = vadd.f32 %v368, %v601
        %603 = vmatprep.mubr.f32.mxu0 0.0
        %604 = vmatmul.mubr.f32.gmra.mxu0 %v291
        %v605 = vpop.f32.mrf.mxu0
        %v606 = vadd.f32 %v364, %v605
        %v607 = vpop.f32.mrf.mxu0
        %v608 = vadd.f32 %v368, %v607
        %609 = vmatprep.mubr.f32.mxu0 0.0
        %610 = vmatmul.mubr.f32.gmra.mxu0 %v292
        %v611 = vpop.f32.mrf.mxu0
        %v612 = vadd.f32 %v364, %v611
        %v613 = vpop.f32.mrf.mxu0
        %v614 = vadd.f32 %v368, %v613
        %615 = vmatprep.mubr.f32.mxu0 0.0
        %616 = vmatmul.mubr.f32.gmra.mxu0 %v293
        %v617 = vpop.f32.mrf.mxu0
        %v618 = vadd.f32 %v364, %v617
        %v619 = vpop.f32.mrf.mxu0
        %v620 = vadd.f32 %v368, %v619
        %621 = vmatprep.mubr.f32.mxu0 0.0
        %622 = vmatmul.mubr.f32.gmra.mxu0 %v294
        %v623 = vpop.f32.mrf.mxu0
        %v624 = vadd.f32 %v364, %v623
        %v625 = vpop.f32.mrf.mxu0
        %v626 = vadd.f32 %v368, %v625
        %627 = vmatprep.mubr.f32.mxu0 0.0
        %628 = vmatmul.mubr.f32.gmra.mxu0 %v295
        %v629 = vpop.f32.mrf.mxu0
        %v630 = vadd.f32 %v364, %v629
        %v631 = vpop.f32.mrf.mxu0
        %v632 = vadd.f32 %v368, %v631
        %633 = vmatprep.mubr.f32.mxu0 0.0
        %634 = vmatmul.mubr.f32.gmra.mxu0 %v296
        %v635 = vpop.f32.mrf.mxu0
        %v636 = vadd.f32 %v364, %v635
        %v637 = vpop.f32.mrf.mxu0
        %v638 = vadd.f32 %v368, %v637
        %639 = vmatprep.mubr.f32.mxu0 0.0
        %640 = vmatmul.mubr.f32.gmra.mxu0 %v297
        %v641 = vpop.f32.mrf.mxu0
        %v642 = vadd.f32 %v364, %v641
        %v643 = vpop.f32.mrf.mxu0
        %v644 = vadd.f32 %v368, %v643
        %645 = vmatprep.mubr.f32.mxu0 0.0
        %646 = vmatmul.mubr.f32.gmra.mxu0 %v298
        %v647 = vpop.f32.mrf.mxu0
        %v648 = vadd.f32 %v364, %v647
        %v649 = vpop.f32.mrf.mxu0
        %v650 = vadd.f32 %v368, %v649
        %651 = vmatprep.mubr.f32.mxu0 0.0
        %652 = vmatmul.mubr.f32.gmra.mxu0 %v299
        %v653 = vpop.f32.mrf.mxu0
        %v654 = vadd.f32 %v364, %v653
        %v655 = vpop.f32.mrf.mxu0
        %v656 = vadd.f32 %v368, %v655
        %657 = vmatprep.mubr.f32.mxu0 0.0
        %658 = vmatmul.mubr.f32.gmra.mxu0 %v300
        %v659 = vpop.f32.mrf.mxu0
        %v660 = vadd.f32 %v364, %v659
        %v661 = vpop.f32.mrf.mxu0
        %v662 = vadd.f32 %v368, %v661
        %663 = vmatprep.mubr.f32.mxu0 0.0
        %664 = vmatmul.mubr.f32.gmra.mxu0 %v301
        %v665 = vpop.f32.mrf.mxu0
        %v666 = vadd.f32 %v364, %v665
        %v667 = vpop.f32.mrf.mxu0
        %v668 = vadd.f32 %v368, %v667
        %669 = vmatprep.mubr.f32.mxu0 0.0
        %670 = vmatmul.mubr.f32.gmra.mxu0 %v302
        %v671 = vpop.f32.mrf.mxu0
        %v672 = vadd.f32 %v364, %v671
        %v673 = vpop.f32.mrf.mxu0
        %v674 = vadd.f32 %v368, %v673
        %675 = vmatprep.mubr.f32.mxu0 0.0
        %676 = vmatmul.mubr.f32.gmra.mxu0 %v303
        %v677 = vpop.f32.mrf.mxu0
        %v678 = vadd.f32 %v364, %v677
        %v679 = vpop.f32.mrf.mxu0
        %v680 = vadd.f32 %v368, %v679
        %681 = vmatprep.mubr.f32.mxu0 0.0
        %682 = vmatmul.mubr.f32.gmra.mxu0 %v304
        %v683 = vpop.f32.mrf.mxu0
        %v684 = vadd.f32 %v364, %v683
        %v685 = vpop.f32.mrf.mxu0
        %v686 = vadd.f32 %v368, %v685
        %687 = vmatprep.mubr.f32.mxu0 0.0
        %688 = vmatmul.mubr.f32.gmra.mxu0 %v305
        %v689 = vpop.f32.mrf.mxu0
        %v690 = vadd.f32 %v364, %v689
        %v691 = vpop.f32.mrf.mxu0
        %v692 = vadd.f32 %v368, %v691
        %693 = vmatprep.mubr.f32.mxu0 0.0
        %694 = vmatmul.mubr.f32.gmra.mxu0 %v306
        %v695 = vpop.f32.mrf.mxu0
        %v696 = vadd.f32 %v364, %v695
        %v697 = vpop.f32.mrf.mxu0
        %v698 = vadd.f32 %v368, %v697
        %699 = vmatprep.mubr.f32.mxu0 0.0
        %700 = vmatmul.mubr.f32.gmra.mxu0 %v307
        %v701 = vpop.f32.mrf.mxu0
        %v702 = vadd.f32 %v364, %v701
        %v703 = vpop.f32.mrf.mxu0
        %v704 = vadd.f32 %v368, %v703
        %705 = vmatprep.mubr.f32.mxu0 0.0
        %706 = vmatmul.mubr.f32.gmra.mxu0 %v308
        %v707 = vpop.f32.mrf.mxu0
        %v708 = vadd.f32 %v364, %v707
        %v709 = vpop.f32.mrf.mxu0
        %v710 = vadd.f32 %v368, %v709
        %711 = vmatprep.mubr.f32.mxu0 0.0
        %712 = vmatmul.mubr.f32.gmra.mxu0 %v309
        %v713 = vpop.f32.mrf.mxu0
        %v714 = vadd.f32 %v364, %v713
        %v715 = vpop.f32.mrf.mxu0
        %v716 = vadd.f32 %v368, %v715
        %717 = vmatprep.mubr.f32.mxu0 0.0
        %718 = vmatmul.mubr.f32.gmra.mxu0 %v310
        %v719 = vpop.f32.mrf.mxu0
        %v720 = vadd.f32 %v364, %v719
        %v721 = vpop.f32.mrf.mxu0
        %v722 = vadd.f32 %v368, %v721
        %723 = vmatprep.mubr.f32.mxu0 0.0
        %724 = vmatmul.mubr.f32.gmra.mxu0 %v311
        %v725 = vpop.f32.mrf.mxu0
        %v726 = vadd.f32 %v364, %v725
        %v727 = vpop.f32.mrf.mxu0
        %v728 = vadd.f32 %v368, %v727
        %729 = vmatprep.mubr.f32.mxu0 0.0
        %730 = vmatmul.mubr.f32.gmra.mxu0 %v312
        %v731 = vpop.f32.mrf.mxu0
        %v732 = vadd.f32 %v364, %v731
        %v733 = vpop.f32.mrf.mxu0
        %v734 = vadd.f32 %v368, %v733
        %735 = vmatprep.mubr.f32.mxu0 0.0
        %736 = vmatmul.mubr.f32.gmra.mxu0 %v313
        %v737 = vpop.f32.mrf.mxu0
        %v738 = vadd.f32 %v364, %v737
        %v739 = vpop.f32.mrf.mxu0
        %v740 = vadd.f32 %v368, %v739
        %741 = vmatprep.mubr.f32.mxu0 0.0
        %742 = vmatmul.mubr.f32.gmra.mxu0 %v314
        %v743 = vpop.f32.mrf.mxu0
        %v744 = vadd.f32 %v364, %v743
        %v745 = vpop.f32.mrf.mxu0
        %v746 = vadd.f32 %v368, %v745
        %747 = vmatprep.mubr.f32.mxu0 0.0
        %748 = vmatmul.mubr.f32.gmra.mxu0 %v315
        %v749 = vpop.f32.mrf.mxu0
        %v750 = vadd.f32 %v364, %v749
        %v751 = vpop.f32.mrf.mxu0
        %v752 = vadd.f32 %v368, %v751
        %753 = vmatprep.mubr.f32.mxu0 0.0
        %754 = vmatmul.mubr.f32.gmra.mxu0 %v316
        %v755 = vpop.f32.mrf.mxu0
        %v756 = vadd.f32 %v364, %v755
        %v757 = vpop.f32.mrf.mxu0
        %v758 = vadd.f32 %v368, %v757
        %759 = vmatprep.mubr.f32.mxu0 0.0
        %760 = vmatmul.mubr.f32.gmra.mxu0 %v317
        %v761 = vpop.f32.mrf.mxu0
        %v762 = vadd.f32 %v364, %v761
        %v763 = vpop.f32.mrf.mxu0
        %v764 = vadd.f32 %v368, %v763
        %765 = vmatprep.mubr.f32.mxu0 0.0
        %766 = vmatmul.mubr.f32.gmra.mxu0 %v318
        %v767 = vpop.f32.mrf.mxu0
        %v768 = vadd.f32 %v364, %v767
        %v769 = vpop.f32.mrf.mxu0
        %v770 = vadd.f32 %v368, %v769
        %771 = vmatprep.mubr.f32.mxu0 0.0
        %772 = vmatmul.mubr.f32.gmra.mxu0 %v319
        %v773 = vpop.f32.mrf.mxu0
        %v774 = vadd.f32 %v364, %v773
        %v775 = vpop.f32.mrf.mxu0
        %v776 = vadd.f32 %v368, %v775
        %777 = vmatprep.mubr.f32.mxu0 0.0
        %778 = vmatmul.mubr.f32.gmra.mxu0 %v320
        %v779 = vpop.f32.mrf.mxu0
        %v780 = vadd.f32 %v364, %v779
        %v781 = vpop.f32.mrf.mxu0
        %v782 = vadd.f32 %v368, %v781
        %783 = vmatprep.mubr.f32.mxu0 0.0
        %784 = vmatmul.mubr.f32.gmra.mxu0 %v321
        %v785 = vpop.f32.mrf.mxu0
        %v786 = vadd.f32 %v364, %v785
        %v787 = vpop.f32.mrf.mxu0
        %v788 = vadd.f32 %v368, %v787
        %789 = vmatprep.mubr.f32.mxu0 0.0
        %790 = vmatmul.mubr.f32.gmra.mxu0 %v322
        %v791 = vpop.f32.mrf.mxu0
        %v792 = vadd.f32 %v364, %v791
        %v793 = vpop.f32.mrf.mxu0
        %v794 = vadd.f32 %v368, %v793
        %795 = vmatprep.mubr.f32.mxu0 0.0
        %796 = vmatmul.mubr.f32.gmra.mxu0 %v323
        %v797 = vpop.f32.mrf.mxu0
        %v798 = vadd.f32 %v364, %v797
        %v799 = vpop.f32.mrf.mxu0
        %v800 = vadd.f32 %v368, %v799
        %801 = vmatprep.mubr.f32.mxu0 0.0
        %802 = vmatmul.mubr.f32.gmra.mxu0 %v324
        %v803 = vpop.f32.mrf.mxu0
        %v804 = vadd.f32 %v364, %v803
        %v805 = vpop.f32.mrf.mxu0
        %v806 = vadd.f32 %v368, %v805
        %807 = vmatprep.mubr.f32.mxu0 0.0
        %808 = vmatmul.mubr.f32.gmra.mxu0 %v325
        %v809 = vpop.f32.mrf.mxu0
        %v810 = vadd.f32 %v364, %v809
        %v811 = vpop.f32.mrf.mxu0
        %v812 = vadd.f32 %v368, %v811
        %813 = vmatprep.mubr.f32.mxu0 0.0
        %814 = vmatmul.mubr.f32.gmra.mxu0 %v326
        %v815 = vpop.f32.mrf.mxu0
        %v816 = vadd.f32 %v364, %v815
        %v817 = vpop.f32.mrf.mxu0
        %v818 = vadd.f32 %v368, %v817
        %819 = vdwg.mxu0
        %v820 = vmax.f32 %v438, 0.0
        %v821 = vmax.f32 %v440, 0.0
        %v822 = vmax.f32 %v444, 0.0
        %v823 = vmax.f32 %v446, 0.0
        %v824 = vmax.f32 %v450, 0.0
        %v825 = vmax.f32 %v452, 0.0
        %v826 = vmax.f32 %v456, 0.0
        %v827 = vmax.f32 %v458, 0.0
        %v828 = vmax.f32 %v462, 0.0
        %v829 = vmax.f32 %v464, 0.0
        %v830 = vmax.f32 %v468, 0.0
        %v831 = vmax.f32 %v470, 0.0
        %v832 = vmax.f32 %v474, 0.0
        %v833 = vmax.f32 %v476, 0.0
        %v834 = vmax.f32 %v480, 0.0
        %v835 = vmax.f32 %v482, 0.0
        %v836 = vmax.f32 %v486, 0.0
        %v837 = vmax.f32 %v488, 0.0
        %v838 = vmax.f32 %v492, 0.0
        %v839 = vmax.f32 %v494, 0.0
        %v840 = vmax.f32 %v498, 0.0
        %v841 = vmax.f32 %v500, 0.0
        %v842 = vmax.f32 %v504, 0.0
        %v843 = vmax.f32 %v506, 0.0
        %v844 = vmax.f32 %v510, 0.0
        %v845 = vmax.f32 %v512, 0.0
        %v846 = vmax.f32 %v516, 0.0
        %v847 = vmax.f32 %v518, 0.0
        %v848 = vmax.f32 %v522, 0.0
        %v849 = vmax.f32 %v524, 0.0
        %v850 = vmax.f32 %v528, 0.0
        %v851 = vmax.f32 %v530, 0.0
        %v852 = vmax.f32 %v534, 0.0
        %v853 = vmax.f32 %v536, 0.0
        %v854 = vmax.f32 %v540, 0.0
        %v855 = vmax.f32 %v542, 0.0
        %v856 = vmax.f32 %v546, 0.0
        %v857 = vmax.f32 %v548, 0.0
        %v858 = vmax.f32 %v552, 0.0
        %v859 = vmax.f32 %v554, 0.0
        %v860 = vmax.f32 %v558, 0.0
        %v861 = vmax.f32 %v560, 0.0
        %v862 = vmax.f32 %v564, 0.0
        %v863 = vmax.f32 %v566, 0.0
        %v864 = vmax.f32 %v570, 0.0
        %v865 = vmax.f32 %v572, 0.0
        %v866 = vmax.f32 %v576, 0.0
        %v867 = vmax.f32 %v578, 0.0
        %v868 = vmax.f32 %v582, 0.0
        %v869 = vmax.f32 %v584, 0.0
        %v870 = vmax.f32 %v588, 0.0
        %v871 = vmax.f32 %v590, 0.0
        %v872 = vmax.f32 %v594, 0.0
        %v873 = vmax.f32 %v596, 0.0
        %v874 = vmax.f32 %v600, 0.0
        %v875 = vmax.f32 %v602, 0.0
        %v876 = vmax.f32 %v606, 0.0
        %v877 = vmax.f32 %v608, 0.0
        %v878 = vmax.f32 %v612, 0.0
        %v879 = vmax.f32 %v614, 0.0
        %v880 = vmax.f32 %v618, 0.0
        %v881 = vmax.f32 %v620, 0.0
        %v882 = vmax.f32 %v624, 0.0
        %v883 = vmax.f32 %v626, 0.0
        %v884 = vmax.f32 %v630, 0.0
        %v885 = vmax.f32 %v632, 0.0
        %v886 = vmax.f32 %v636, 0.0
        %v887 = vmax.f32 %v638, 0.0
        %v888 = vmax.f32 %v642, 0.0
        %v889 = vmax.f32 %v644, 0.0
        %v890 = vmax.f32 %v648, 0.0
        %v891 = vmax.f32 %v650, 0.0
        %v892 = vmax.f32 %v654, 0.0
        %v893 = vmax.f32 %v656, 0.0
        %v894 = vmax.f32 %v660, 0.0
        %v895 = vmax.f32 %v662, 0.0
        %v896 = vmax.f32 %v666, 0.0
        %v897 = vmax.f32 %v668, 0.0
        %v898 = vmax.f32 %v672, 0.0
        %v899 = vmax.f32 %v674, 0.0
        %v900 = vmax.f32 %v678, 0.0
        %v901 = vmax.f32 %v680, 0.0
        %v902 = vmax.f32 %v684, 0.0
        %v903 = vmax.f32 %v686, 0.0
        %v904 = vmax.f32 %v690, 0.0
        %v905 = vmax.f32 %v692, 0.0
        %v906 = vmax.f32 %v696, 0.0
        %v907 = vmax.f32 %v698, 0.0
        %v908 = vmax.f32 %v702, 0.0
        %v909 = vmax.f32 %v704, 0.0
        %v910 = vmax.f32 %v708, 0.0
        %v911 = vmax.f32 %v710, 0.0
        %v912 = vmax.f32 %v714, 0.0
        %v913 = vmax.f32 %v716, 0.0
        %v914 = vmax.f32 %v720, 0.0
        %v915 = vmax.f32 %v722, 0.0
        %v916 = vmax.f32 %v726, 0.0
        %v917 = vmax.f32 %v728, 0.0
        %v918 = vmax.f32 %v732, 0.0
        %v919 = vmax.f32 %v734, 0.0
        %v920 = vmax.f32 %v738, 0.0
        %v921 = vmax.f32 %v740, 0.0
        %v922 = vmax.f32 %v744, 0.0
        %v923 = vmax.f32 %v746, 0.0
        %v924 = vmax.f32 %v750, 0.0
        %v925 = vmax.f32 %v752, 0.0
        %v926 = vmax.f32 %v756, 0.0
        %v927 = vmax.f32 %v758, 0.0
        %v928 = vmax.f32 %v762, 0.0
        %v929 = vmax.f32 %v764, 0.0
        %v930 = vmax.f32 %v768, 0.0
        %v931 = vmax.f32 %v770, 0.0
        %v932 = vmax.f32 %v774, 0.0
        %v933 = vmax.f32 %v776, 0.0
        %v934 = vmax.f32 %v780, 0.0
        %v935 = vmax.f32 %v782, 0.0
        %v936 = vmax.f32 %v786, 0.0
        %v937 = vmax.f32 %v788, 0.0
        %v938 = vmax.f32 %v792, 0.0
        %v939 = vmax.f32 %v794, 0.0
        %v940 = vmax.f32 %v798, 0.0
        %v941 = vmax.f32 %v800, 0.0
        %v942 = vmax.f32 %v804, 0.0
        %v943 = vmax.f32 %v806, 0.0
        %v944 = vmax.f32 %v810, 0.0
        %v945 = vmax.f32 %v812, 0.0
        %v946 = vmax.f32 %v816, 0.0
        %v947 = vmax.f32 %v818, 0.0
        %v948 = vld [vmem:[%s3] sm:$0x3]
        %v950 = vlaneseq
        %v951 = vshrl.u32 %v950, 7
        %v952 = vsub.s32 0, %v951
        %v953 = vrot.slane %v948, %v952
        %v954 = vlaneseq
        %v955 = vshrl.u32 %v954, 7
        %v956 = vsub.s32 1, %v955
        %v957 = vrot.slane %v948, %v956
        %v960 = vmul.f32 %v820, %v953
        %v961 = vmul.f32 %v821, %v957
        %v962 = vmul.f32 %v822, %v953
        %v963 = vmul.f32 %v823, %v957
        %v964 = vmul.f32 %v824, %v953
        %v965 = vmul.f32 %v825, %v957
        %v966 = vmul.f32 %v826, %v953
        %v967 = vmul.f32 %v827, %v957
        %v968 = vmul.f32 %v828, %v953
        %v969 = vmul.f32 %v829, %v957
        %v970 = vmul.f32 %v830, %v953
        %v971 = vmul.f32 %v831, %v957
        %v972 = vmul.f32 %v832, %v953
        %v973 = vmul.f32 %v833, %v957
        %v974 = vmul.f32 %v834, %v953
        %v975 = vmul.f32 %v835, %v957
        %v976 = vmul.f32 %v836, %v953
        %v977 = vmul.f32 %v837, %v957
        %v978 = vmul.f32 %v838, %v953
        %v979 = vmul.f32 %v839, %v957
        %v980 = vmul.f32 %v840, %v953
        %v981 = vmul.f32 %v841, %v957
        %v982 = vmul.f32 %v842, %v953
        %v983 = vmul.f32 %v843, %v957
        %v984 = vmul.f32 %v844, %v953
        %v985 = vmul.f32 %v845, %v957
        %v986 = vmul.f32 %v846, %v953
        %v987 = vmul.f32 %v847, %v957
        %v988 = vmul.f32 %v848, %v953
        %v989 = vmul.f32 %v849, %v957
        %v990 = vmul.f32 %v850, %v953
        %v991 = vmul.f32 %v851, %v957
        %v992 = vmul.f32 %v852, %v953
        %v993 = vmul.f32 %v853, %v957
        %v994 = vmul.f32 %v854, %v953
        %v995 = vmul.f32 %v855, %v957
        %v996 = vmul.f32 %v856, %v953
        %v997 = vmul.f32 %v857, %v957
        %v998 = vmul.f32 %v858, %v953
        %v999 = vmul.f32 %v859, %v957
        %v1000 = vmul.f32 %v860, %v953
        %v1001 = vmul.f32 %v861, %v957
        %v1002 = vmul.f32 %v862, %v953
        %v1003 = vmul.f32 %v863, %v957
        %v1004 = vmul.f32 %v864, %v953
        %v1005 = vmul.f32 %v865, %v957
        %v1006 = vmul.f32 %v866, %v953
        %v1007 = vmul.f32 %v867, %v957
        %v1008 = vmul.f32 %v868, %v953
        %v1009 = vmul.f32 %v869, %v957
        %v1010 = vmul.f32 %v870, %v953
        %v1011 = vmul.f32 %v871, %v957
        %v1012 = vmul.f32 %v872, %v953
        %v1013 = vmul.f32 %v873, %v957
        %v1014 = vmul.f32 %v874, %v953
        %v1015 = vmul.f32 %v875, %v957
        %v1016 = vmul.f32 %v876, %v953
        %v1017 = vmul.f32 %v877, %v957
        %v1018 = vmul.f32 %v878, %v953
        %v1019 = vmul.f32 %v879, %v957
        %v1020 = vmul.f32 %v880, %v953
        %v1021 = vmul.f32 %v881, %v957
        %v1022 = vmul.f32 %v882, %v953
        %v1023 = vmul.f32 %v883, %v957
        %v1024 = vmul.f32 %v884, %v953
        %v1025 = vmul.f32 %v885, %v957
        %v1026 = vmul.f32 %v886, %v953
        %v1027 = vmul.f32 %v887, %v957
        %v1028 = vmul.f32 %v888, %v953
        %v1029 = vmul.f32 %v889, %v957
        %v1030 = vmul.f32 %v890, %v953
        %v1031 = vmul.f32 %v891, %v957
        %v1032 = vmul.f32 %v892, %v953
        %v1033 = vmul.f32 %v893, %v957
        %v1034 = vmul.f32 %v894, %v953
        %v1035 = vmul.f32 %v895, %v957
        %v1036 = vmul.f32 %v896, %v953
        %v1037 = vmul.f32 %v897, %v957
        %v1038 = vmul.f32 %v898, %v953
        %v1039 = vmul.f32 %v899, %v957
        %v1040 = vmul.f32 %v900, %v953
        %v1041 = vmul.f32 %v901, %v957
        %v1042 = vmul.f32 %v902, %v953
        %v1043 = vmul.f32 %v903, %v957
        %v1044 = vmul.f32 %v904, %v953
        %v1045 = vmul.f32 %v905, %v957
        %v1046 = vmul.f32 %v906, %v953
        %v1047 = vmul.f32 %v907, %v957
        %v1048 = vmul.f32 %v908, %v953
        %v1049 = vmul.f32 %v909, %v957
        %v1050 = vmul.f32 %v910, %v953
        %v1051 = vmul.f32 %v911, %v957
        %v1052 = vmul.f32 %v912, %v953
        %v1053 = vmul.f32 %v913, %v957
        %v1054 = vmul.f32 %v914, %v953
        %v1055 = vmul.f32 %v915, %v957
        %v1056 = vmul.f32 %v916, %v953
        %v1057 = vmul.f32 %v917, %v957
        %v1058 = vmul.f32 %v918, %v953
        %v1059 = vmul.f32 %v919, %v957
        %v1060 = vmul.f32 %v920, %v953
        %v1061 = vmul.f32 %v921, %v957
        %v1062 = vmul.f32 %v922, %v953
        %v1063 = vmul.f32 %v923, %v957
        %v1064 = vmul.f32 %v924, %v953
        %v1065 = vmul.f32 %v925, %v957
        %v1066 = vmul.f32 %v926, %v953
        %v1067 = vmul.f32 %v927, %v957
        %v1068 = vmul.f32 %v928, %v953
        %v1069 = vmul.f32 %v929, %v957
        %v1070 = vmul.f32 %v930, %v953
        %v1071 = vmul.f32 %v931, %v957
        %v1072 = vmul.f32 %v932, %v953
        %v1073 = vmul.f32 %v933, %v957
        %v1074 = vmul.f32 %v934, %v953
        %v1075 = vmul.f32 %v935, %v957
        %v1076 = vmul.f32 %v936, %v953
        %v1077 = vmul.f32 %v937, %v957
        %v1078 = vmul.f32 %v938, %v953
        %v1079 = vmul.f32 %v939, %v957
        %v1080 = vmul.f32 %v940, %v953
        %v1081 = vmul.f32 %v941, %v957
        %v1082 = vmul.f32 %v942, %v953
        %v1083 = vmul.f32 %v943, %v957
        %v1084 = vmul.f32 %v944, %v953
        %v1085 = vmul.f32 %v945, %v957
        %v1086 = vmul.f32 %v946, %v953
        %v1087 = vmul.f32 %v947, %v957
        %v1088 = vadd.f32 %v960, %v961
        %1089 = vadd.xlane.f32.xlu0 %v1088
        %v1090 = vpop.xlane.xlu0 %1089
        %v1091 = vadd.f32 %v962, %v963
        %1092 = vadd.xlane.f32.xlu0 %v1091
        %v1093 = vpop.xlane.xlu0 %1092
        %v1094 = vadd.f32 %v964, %v965
        %1095 = vadd.xlane.f32.xlu0 %v1094
        %v1096 = vpop.xlane.xlu0 %1095
        %v1097 = vadd.f32 %v966, %v967
        %1098 = vadd.xlane.f32.xlu0 %v1097
        %v1099 = vpop.xlane.xlu0 %1098
        %v1100 = vadd.f32 %v968, %v969
        %1101 = vadd.xlane.f32.xlu0 %v1100
        %v1102 = vpop.xlane.xlu0 %1101
        %v1103 = vadd.f32 %v970, %v971
        %1104 = vadd.xlane.f32.xlu0 %v1103
        %v1105 = vpop.xlane.xlu0 %1104
        %v1106 = vadd.f32 %v972, %v973
        %1107 = vadd.xlane.f32.xlu0 %v1106
        %v1108 = vpop.xlane.xlu0 %1107
        %v1109 = vadd.f32 %v974, %v975
        %1110 = vadd.xlane.f32.xlu0 %v1109
        %v1111 = vpop.xlane.xlu0 %1110
        %v1112 = vadd.f32 %v976, %v977
        %1113 = vadd.xlane.f32.xlu0 %v1112
        %v1114 = vpop.xlane.xlu0 %1113
        %v1115 = vadd.f32 %v978, %v979
        %1116 = vadd.xlane.f32.xlu0 %v1115
        %v1117 = vpop.xlane.xlu0 %1116
        %v1118 = vadd.f32 %v980, %v981
        %1119 = vadd.xlane.f32.xlu0 %v1118
        %v1120 = vpop.xlane.xlu0 %1119
        %v1121 = vadd.f32 %v982, %v983
        %1122 = vadd.xlane.f32.xlu0 %v1121
        %v1123 = vpop.xlane.xlu0 %1122
        %v1124 = vadd.f32 %v984, %v985
        %1125 = vadd.xlane.f32.xlu0 %v1124
        %v1126 = vpop.xlane.xlu0 %1125
        %v1127 = vadd.f32 %v986, %v987
        %1128 = vadd.xlane.f32.xlu0 %v1127
        %v1129 = vpop.xlane.xlu0 %1128
        %v1130 = vadd.f32 %v988, %v989
        %1131 = vadd.xlane.f32.xlu0 %v1130
        %v1132 = vpop.xlane.xlu0 %1131
        %v1133 = vadd.f32 %v990, %v991
        %1134 = vadd.xlane.f32.xlu0 %v1133
        %v1135 = vpop.xlane.xlu0 %1134
        %v1136 = vadd.f32 %v992, %v993
        %1137 = vadd.xlane.f32.xlu0 %v1136
        %v1138 = vpop.xlane.xlu0 %1137
        %v1139 = vadd.f32 %v994, %v995
        %1140 = vadd.xlane.f32.xlu0 %v1139
        %v1141 = vpop.xlane.xlu0 %1140
        %v1142 = vadd.f32 %v996, %v997
        %1143 = vadd.xlane.f32.xlu0 %v1142
        %v1144 = vpop.xlane.xlu0 %1143
        %v1145 = vadd.f32 %v998, %v999
        %1146 = vadd.xlane.f32.xlu0 %v1145
        %v1147 = vpop.xlane.xlu0 %1146
        %v1148 = vadd.f32 %v1000, %v1001
        %1149 = vadd.xlane.f32.xlu0 %v1148
        %v1150 = vpop.xlane.xlu0 %1149
        %v1151 = vadd.f32 %v1002, %v1003
        %1152 = vadd.xlane.f32.xlu0 %v1151
        %v1153 = vpop.xlane.xlu0 %1152
        %v1154 = vadd.f32 %v1004, %v1005
        %1155 = vadd.xlane.f32.xlu0 %v1154
        %v1156 = vpop.xlane.xlu0 %1155
        %v1157 = vadd.f32 %v1006, %v1007
        %1158 = vadd.xlane.f32.xlu0 %v1157
        %v1159 = vpop.xlane.xlu0 %1158
        %v1160 = vadd.f32 %v1008, %v1009
        %1161 = vadd.xlane.f32.xlu0 %v1160
        %v1162 = vpop.xlane.xlu0 %1161
        %v1163 = vadd.f32 %v1010, %v1011
        %1164 = vadd.xlane.f32.xlu0 %v1163
        %v1165 = vpop.xlane.xlu0 %1164
        %v1166 = vadd.f32 %v1012, %v1013
        %1167 = vadd.xlane.f32.xlu0 %v1166
        %v1168 = vpop.xlane.xlu0 %1167
        %v1169 = vadd.f32 %v1014, %v1015
        %1170 = vadd.xlane.f32.xlu0 %v1169
        %v1171 = vpop.xlane.xlu0 %1170
        %v1172 = vadd.f32 %v1016, %v1017
        %1173 = vadd.xlane.f32.xlu0 %v1172
        %v1174 = vpop.xlane.xlu0 %1173
        %v1175 = vadd.f32 %v1018, %v1019
        %1176 = vadd.xlane.f32.xlu0 %v1175
        %v1177 = vpop.xlane.xlu0 %1176
        %v1178 = vadd.f32 %v1020, %v1021
        %1179 = vadd.xlane.f32.xlu0 %v1178
        %v1180 = vpop.xlane.xlu0 %1179
        %v1181 = vadd.f32 %v1022, %v1023
        %1182 = vadd.xlane.f32.xlu0 %v1181
        %v1183 = vpop.xlane.xlu0 %1182
        %v1184 = vadd.f32 %v1024, %v1025
        %1185 = vadd.xlane.f32.xlu0 %v1184
        %v1186 = vpop.xlane.xlu0 %1185
        %v1187 = vadd.f32 %v1026, %v1027
        %1188 = vadd.xlane.f32.xlu0 %v1187
        %v1189 = vpop.xlane.xlu0 %1188
        %v1190 = vadd.f32 %v1028, %v1029
        %1191 = vadd.xlane.f32.xlu0 %v1190
        %v1192 = vpop.xlane.xlu0 %1191
        %v1193 = vadd.f32 %v1030, %v1031
        %1194 = vadd.xlane.f32.xlu0 %v1193
        %v1195 = vpop.xlane.xlu0 %1194
        %v1196 = vadd.f32 %v1032, %v1033
        %1197 = vadd.xlane.f32.xlu0 %v1196
        %v1198 = vpop.xlane.xlu0 %1197
        %v1199 = vadd.f32 %v1034, %v1035
        %1200 = vadd.xlane.f32.xlu0 %v1199
        %v1201 = vpop.xlane.xlu0 %1200
        %v1202 = vadd.f32 %v1036, %v1037
        %1203 = vadd.xlane.f32.xlu0 %v1202
        %v1204 = vpop.xlane.xlu0 %1203
        %v1205 = vadd.f32 %v1038, %v1039
        %1206 = vadd.xlane.f32.xlu0 %v1205
        %v1207 = vpop.xlane.xlu0 %1206
        %v1208 = vadd.f32 %v1040, %v1041
        %1209 = vadd.xlane.f32.xlu0 %v1208
        %v1210 = vpop.xlane.xlu0 %1209
        %v1211 = vadd.f32 %v1042, %v1043
        %1212 = vadd.xlane.f32.xlu0 %v1211
        %v1213 = vpop.xlane.xlu0 %1212
        %v1214 = vadd.f32 %v1044, %v1045
        %1215 = vadd.xlane.f32.xlu0 %v1214
        %v1216 = vpop.xlane.xlu0 %1215
        %v1217 = vadd.f32 %v1046, %v1047
        %1218 = vadd.xlane.f32.xlu0 %v1217
        %v1219 = vpop.xlane.xlu0 %1218
        %v1220 = vadd.f32 %v1048, %v1049
        %1221 = vadd.xlane.f32.xlu0 %v1220
        %v1222 = vpop.xlane.xlu0 %1221
        %v1223 = vadd.f32 %v1050, %v1051
        %1224 = vadd.xlane.f32.xlu0 %v1223
        %v1225 = vpop.xlane.xlu0 %1224
        %v1226 = vadd.f32 %v1052, %v1053
        %1227 = vadd.xlane.f32.xlu0 %v1226
        %v1228 = vpop.xlane.xlu0 %1227
        %v1229 = vadd.f32 %v1054, %v1055
        %1230 = vadd.xlane.f32.xlu0 %v1229
        %v1231 = vpop.xlane.xlu0 %1230
        %v1232 = vadd.f32 %v1056, %v1057
        %1233 = vadd.xlane.f32.xlu0 %v1232
        %v1234 = vpop.xlane.xlu0 %1233
        %v1235 = vadd.f32 %v1058, %v1059
        %1236 = vadd.xlane.f32.xlu0 %v1235
        %v1237 = vpop.xlane.xlu0 %1236
        %v1238 = vadd.f32 %v1060, %v1061
        %1239 = vadd.xlane.f32.xlu0 %v1238
        %v1240 = vpop.xlane.xlu0 %1239
        %v1241 = vadd.f32 %v1062, %v1063
        %1242 = vadd.xlane.f32.xlu0 %v1241
        %v1243 = vpop.xlane.xlu0 %1242
        %v1244 = vadd.f32 %v1064, %v1065
        %1245 = vadd.xlane.f32.xlu0 %v1244
        %v1246 = vpop.xlane.xlu0 %1245
        %v1247 = vadd.f32 %v1066, %v1067
        %1248 = vadd.xlane.f32.xlu0 %v1247
        %v1249 = vpop.xlane.xlu0 %1248
        %v1250 = vadd.f32 %v1068, %v1069
        %1251 = vadd.xlane.f32.xlu0 %v1250
        %v1252 = vpop.xlane.xlu0 %1251
        %v1253 = vadd.f32 %v1070, %v1071
        %1254 = vadd.xlane.f32.xlu0 %v1253
        %v1255 = vpop.xlane.xlu0 %1254
        %v1256 = vadd.f32 %v1072, %v1073
        %1257 = vadd.xlane.f32.xlu0 %v1256
        %v1258 = vpop.xlane.xlu0 %1257
        %v1259 = vadd.f32 %v1074, %v1075
        %1260 = vadd.xlane.f32.xlu0 %v1259
        %v1261 = vpop.xlane.xlu0 %1260
        %v1262 = vadd.f32 %v1076, %v1077
        %1263 = vadd.xlane.f32.xlu0 %v1262
        %v1264 = vpop.xlane.xlu0 %1263
        %v1265 = vadd.f32 %v1078, %v1079
        %1266 = vadd.xlane.f32.xlu0 %v1265
        %v1267 = vpop.xlane.xlu0 %1266
        %v1268 = vadd.f32 %v1080, %v1081
        %1269 = vadd.xlane.f32.xlu0 %v1268
        %v1270 = vpop.xlane.xlu0 %1269
        %v1271 = vadd.f32 %v1082, %v1083
        %1272 = vadd.xlane.f32.xlu0 %v1271
        %v1273 = vpop.xlane.xlu0 %1272
        %v1274 = vadd.f32 %v1084, %v1085
        %1275 = vadd.xlane.f32.xlu0 %v1274
        %v1276 = vpop.xlane.xlu0 %1275
        %v1277 = vadd.f32 %v1086, %v1087
        %1278 = vadd.xlane.f32.xlu0 %v1277
        %v1279 = vpop.xlane.xlu0 %1278
        %s1280 = sld [smem:[#allocation2]]
        %v1281 = vstv %s1280
        %v1282 = vadd.f32 %v1090, %v1281
        %v1283 = vadd.f32 %v1093, %v1281
        %v1284 = vadd.f32 %v1096, %v1281
        %v1285 = vadd.f32 %v1099, %v1281
        %v1286 = vadd.f32 %v1102, %v1281
        %v1287 = vadd.f32 %v1105, %v1281
        %v1288 = vadd.f32 %v1108, %v1281
        %v1289 = vadd.f32 %v1111, %v1281
        %v1290 = vadd.f32 %v1114, %v1281
        %v1291 = vadd.f32 %v1117, %v1281
        %v1292 = vadd.f32 %v1120, %v1281
        %v1293 = vadd.f32 %v1123, %v1281
        %v1294 = vadd.f32 %v1126, %v1281
        %v1295 = vadd.f32 %v1129, %v1281
        %v1296 = vadd.f32 %v1132, %v1281
        %v1297 = vadd.f32 %v1135, %v1281
        %v1298 = vadd.f32 %v1138, %v1281
        %v1299 = vadd.f32 %v1141, %v1281
        %v1300 = vadd.f32 %v1144, %v1281
        %v1301 = vadd.f32 %v1147, %v1281
        %v1302 = vadd.f32 %v1150, %v1281
        %v1303 = vadd.f32 %v1153, %v1281
        %v1304 = vadd.f32 %v1156, %v1281
        %v1305 = vadd.f32 %v1159, %v1281
        %v1306 = vadd.f32 %v1162, %v1281
        %v1307 = vadd.f32 %v1165, %v1281
        %v1308 = vadd.f32 %v1168, %v1281
        %v1309 = vadd.f32 %v1171, %v1281
        %v1310 = vadd.f32 %v1174, %v1281
        %v1311 = vadd.f32 %v1177, %v1281
        %v1312 = vadd.f32 %v1180, %v1281
        %v1313 = vadd.f32 %v1183, %v1281
        %v1314 = vadd.f32 %v1186, %v1281
        %v1315 = vadd.f32 %v1189, %v1281
        %v1316 = vadd.f32 %v1192, %v1281
        %v1317 = vadd.f32 %v1195, %v1281
        %v1318 = vadd.f32 %v1198, %v1281
        %v1319 = vadd.f32 %v1201, %v1281
        %v1320 = vadd.f32 %v1204, %v1281
        %v1321 = vadd.f32 %v1207, %v1281
        %v1322 = vadd.f32 %v1210, %v1281
        %v1323 = vadd.f32 %v1213, %v1281
        %v1324 = vadd.f32 %v1216, %v1281
        %v1325 = vadd.f32 %v1219, %v1281
        %v1326 = vadd.f32 %v1222, %v1281
        %v1327 = vadd.f32 %v1225, %v1281
        %v1328 = vadd.f32 %v1228, %v1281
        %v1329 = vadd.f32 %v1231, %v1281
        %v1330 = vadd.f32 %v1234, %v1281
        %v1331 = vadd.f32 %v1237, %v1281
        %v1332 = vadd.f32 %v1240, %v1281
        %v1333 = vadd.f32 %v1243, %v1281
        %v1334 = vadd.f32 %v1246, %v1281
        %v1335 = vadd.f32 %v1249, %v1281
        %v1336 = vadd.f32 %v1252, %v1281
        %v1337 = vadd.f32 %v1255, %v1281
        %v1338 = vadd.f32 %v1258, %v1281
        %v1339 = vadd.f32 %v1261, %v1281
        %v1340 = vadd.f32 %v1264, %v1281
        %v1341 = vadd.f32 %v1267, %v1281
        %v1342 = vadd.f32 %v1270, %v1281
        %v1343 = vadd.f32 %v1273, %v1281
        %v1344 = vadd.f32 %v1276, %v1281
        %v1345 = vadd.f32 %v1279, %v1281
        %v1346 = vxor.u32 %v1282, 2147483648
        %v1347 = vxor.u32 %v1283, 2147483648
        %v1348 = vxor.u32 %v1284, 2147483648
        %v1349 = vxor.u32 %v1285, 2147483648
        %v1350 = vxor.u32 %v1286, 2147483648
        %v1351 = vxor.u32 %v1287, 2147483648
        %v1352 = vxor.u32 %v1288, 2147483648
        %v1353 = vxor.u32 %v1289, 2147483648
        %v1354 = vxor.u32 %v1290, 2147483648
        %v1355 = vxor.u32 %v1291, 2147483648
        %v1356 = vxor.u32 %v1292, 2147483648
        %v1357 = vxor.u32 %v1293, 2147483648
        %v1358 = vxor.u32 %v1294, 2147483648
        %v1359 = vxor.u32 %v1295, 2147483648
        %v1360 = vxor.u32 %v1296, 2147483648
        %v1361 = vxor.u32 %v1297, 2147483648
        %v1362 = vxor.u32 %v1298, 2147483648
        %v1363 = vxor.u32 %v1299, 2147483648
        %v1364 = vxor.u32 %v1300, 2147483648
        %v1365 = vxor.u32 %v1301, 2147483648
        %v1366 = vxor.u32 %v1302, 2147483648
        %v1367 = vxor.u32 %v1303, 2147483648
        %v1368 = vxor.u32 %v1304, 2147483648
        %v1369 = vxor.u32 %v1305, 2147483648
        %v1370 = vxor.u32 %v1306, 2147483648
        %v1371 = vxor.u32 %v1307, 2147483648
        %v1372 = vxor.u32 %v1308, 2147483648
        %v1373 = vxor.u32 %v1309, 2147483648
        %v1374 = vxor.u32 %v1310, 2147483648
        %v1375 = vxor.u32 %v1311, 2147483648
        %v1376 = vxor.u32 %v1312, 2147483648
        %v1377 = vxor.u32 %v1313, 2147483648
        %v1378 = vxor.u32 %v1314, 2147483648
        %v1379 = vxor.u32 %v1315, 2147483648
        %v1380 = vxor.u32 %v1316, 2147483648
        %v1381 = vxor.u32 %v1317, 2147483648
        %v1382 = vxor.u32 %v1318, 2147483648
        %v1383 = vxor.u32 %v1319, 2147483648
        %v1384 = vxor.u32 %v1320, 2147483648
        %v1385 = vxor.u32 %v1321, 2147483648
        %v1386 = vxor.u32 %v1322, 2147483648
        %v1387 = vxor.u32 %v1323, 2147483648
        %v1388 = vxor.u32 %v1324, 2147483648
        %v1389 = vxor.u32 %v1325, 2147483648
        %v1390 = vxor.u32 %v1326, 2147483648
        %v1391 = vxor.u32 %v1327, 2147483648
        %v1392 = vxor.u32 %v1328, 2147483648
        %v1393 = vxor.u32 %v1329, 2147483648
        %v1394 = vxor.u32 %v1330, 2147483648
        %v1395 = vxor.u32 %v1331, 2147483648
        %v1396 = vxor.u32 %v1332, 2147483648
        %v1397 = vxor.u32 %v1333, 2147483648
        %v1398 = vxor.u32 %v1334, 2147483648
        %v1399 = vxor.u32 %v1335, 2147483648
        %v1400 = vxor.u32 %v1336, 2147483648
        %v1401 = vxor.u32 %v1337, 2147483648
        %v1402 = vxor.u32 %v1338, 2147483648
        %v1403 = vxor.u32 %v1339, 2147483648
        %v1404 = vxor.u32 %v1340, 2147483648
        %v1405 = vxor.u32 %v1341, 2147483648
        %v1406 = vxor.u32 %v1342, 2147483648
        %v1407 = vxor.u32 %v1343, 2147483648
        %v1408 = vxor.u32 %v1344, 2147483648
        %v1409 = vxor.u32 %v1345, 2147483648
        %v1410 = vmul.f32 %v1346, 1.442695
        %v1411 = vpow.pop %v1410
        %v1412 = vmul.f32 %v1347, 1.442695
        %v1413 = vpow.pop %v1412
        %v1414 = vmul.f32 %v1348, 1.442695
        %v1415 = vpow.pop %v1414
        %v1416 = vmul.f32 %v1349, 1.442695
        %v1417 = vpow.pop %v1416
        %v1418 = vmul.f32 %v1350, 1.442695
        %v1419 = vpow.pop %v1418
        %v1420 = vmul.f32 %v1351, 1.442695
        %v1421 = vpow.pop %v1420
        %v1422 = vmul.f32 %v1352, 1.442695
        %v1423 = vpow.pop %v1422
        %v1424 = vmul.f32 %v1353, 1.442695
        %v1425 = vpow.pop %v1424
        %v1426 = vmul.f32 %v1354, 1.442695
        %v1427 = vpow.pop %v1426
        %v1428 = vmul.f32 %v1355, 1.442695
        %v1429 = vpow.pop %v1428
        %v1430 = vmul.f32 %v1356, 1.442695
        %v1431 = vpow.pop %v1430
        %v1432 = vmul.f32 %v1357, 1.442695
        %v1433 = vpow.pop %v1432
        %v1434 = vmul.f32 %v1358, 1.442695
        %v1435 = vpow.pop %v1434
        %v1436 = vmul.f32 %v1359, 1.442695
        %v1437 = vpow.pop %v1436
        %v1438 = vmul.f32 %v1360, 1.442695
        %v1439 = vpow.pop %v1438
        %v1440 = vmul.f32 %v1361, 1.442695
        %v1441 = vpow.pop %v1440
        %v1442 = vmul.f32 %v1362, 1.442695
        %v1443 = vpow.pop %v1442
        %v1444 = vmul.f32 %v1363, 1.442695
        %v1445 = vpow.pop %v1444
        %v1446 = vmul.f32 %v1364, 1.442695
        %v1447 = vpow.pop %v1446
        %v1448 = vmul.f32 %v1365, 1.442695
        %v1449 = vpow.pop %v1448
        %v1450 = vmul.f32 %v1366, 1.442695
        %v1451 = vpow.pop %v1450
        %v1452 = vmul.f32 %v1367, 1.442695
        %v1453 = vpow.pop %v1452
        %v1454 = vmul.f32 %v1368, 1.442695
        %v1455 = vpow.pop %v1454
        %v1456 = vmul.f32 %v1369, 1.442695
        %v1457 = vpow.pop %v1456
        %v1458 = vmul.f32 %v1370, 1.442695
        %v1459 = vpow.pop %v1458
        %v1460 = vmul.f32 %v1371, 1.442695
        %v1461 = vpow.pop %v1460
        %v1462 = vmul.f32 %v1372, 1.442695
        %v1463 = vpow.pop %v1462
        %v1464 = vmul.f32 %v1373, 1.442695
        %v1465 = vpow.pop %v1464
        %v1466 = vmul.f32 %v1374, 1.442695
        %v1467 = vpow.pop %v1466
        %v1468 = vmul.f32 %v1375, 1.442695
        %v1469 = vpow.pop %v1468
        %v1470 = vmul.f32 %v1376, 1.442695
        %v1471 = vpow.pop %v1470
        %v1472 = vmul.f32 %v1377, 1.442695
        %v1473 = vpow.pop %v1472
        %v1474 = vmul.f32 %v1378, 1.442695
        %v1475 = vpow.pop %v1474
        %v1476 = vmul.f32 %v1379, 1.442695
        %v1477 = vpow.pop %v1476
        %v1478 = vmul.f32 %v1380, 1.442695
        %v1479 = vpow.pop %v1478
        %v1480 = vmul.f32 %v1381, 1.442695
        %v1481 = vpow.pop %v1480
        %v1482 = vmul.f32 %v1382, 1.442695
        %v1483 = vpow.pop %v1482
        %v1484 = vmul.f32 %v1383, 1.442695
        %v1485 = vpow.pop %v1484
        %v1486 = vmul.f32 %v1384, 1.442695
        %v1487 = vpow.pop %v1486
        %v1488 = vmul.f32 %v1385, 1.442695
        %v1489 = vpow.pop %v1488
        %v1490 = vmul.f32 %v1386, 1.442695
        %v1491 = vpow.pop %v1490
        %v1492 = vmul.f32 %v1387, 1.442695
        %v1493 = vpow.pop %v1492
        %v1494 = vmul.f32 %v1388, 1.442695
        %v1495 = vpow.pop %v1494
        %v1496 = vmul.f32 %v1389, 1.442695
        %v1497 = vpow.pop %v1496
        %v1498 = vmul.f32 %v1390, 1.442695
        %v1499 = vpow.pop %v1498
        %v1500 = vmul.f32 %v1391, 1.442695
        %v1501 = vpow.pop %v1500
        %v1502 = vmul.f32 %v1392, 1.442695
        %v1503 = vpow.pop %v1502
        %v1504 = vmul.f32 %v1393, 1.442695
        %v1505 = vpow.pop %v1504
        %v1506 = vmul.f32 %v1394, 1.442695
        %v1507 = vpow.pop %v1506
        %v1508 = vmul.f32 %v1395, 1.442695
        %v1509 = vpow.pop %v1508
        %v1510 = vmul.f32 %v1396, 1.442695
        %v1511 = vpow.pop %v1510
        %v1512 = vmul.f32 %v1397, 1.442695
        %v1513 = vpow.pop %v1512
        %v1514 = vmul.f32 %v1398, 1.442695
        %v1515 = vpow.pop %v1514
        %v1516 = vmul.f32 %v1399, 1.442695
        %v1517 = vpow.pop %v1516
        %v1518 = vmul.f32 %v1400, 1.442695
        %v1519 = vpow.pop %v1518
        %v1520 = vmul.f32 %v1401, 1.442695
        %v1521 = vpow.pop %v1520
        %v1522 = vmul.f32 %v1402, 1.442695
        %v1523 = vpow.pop %v1522
        %v1524 = vmul.f32 %v1403, 1.442695
        %v1525 = vpow.pop %v1524
        %v1526 = vmul.f32 %v1404, 1.442695
        %v1527 = vpow.pop %v1526
        %v1528 = vmul.f32 %v1405, 1.442695
        %v1529 = vpow.pop %v1528
        %v1530 = vmul.f32 %v1406, 1.442695
        %v1531 = vpow.pop %v1530
        %v1532 = vmul.f32 %v1407, 1.442695
        %v1533 = vpow.pop %v1532
        %v1534 = vmul.f32 %v1408, 1.442695
        %v1535 = vpow.pop %v1534
        %v1536 = vmul.f32 %v1409, 1.442695
        %v1537 = vpow.pop %v1536
        %v1538 = vadd.f32 %v1411, 1.0
        %v1539 = vadd.f32 %v1413, 1.0
        %v1540 = vadd.f32 %v1415, 1.0
        %v1541 = vadd.f32 %v1417, 1.0
        %v1542 = vadd.f32 %v1419, 1.0
        %v1543 = vadd.f32 %v1421, 1.0
        %v1544 = vadd.f32 %v1423, 1.0
        %v1545 = vadd.f32 %v1425, 1.0
        %v1546 = vadd.f32 %v1427, 1.0
        %v1547 = vadd.f32 %v1429, 1.0
        %v1548 = vadd.f32 %v1431, 1.0
        %v1549 = vadd.f32 %v1433, 1.0
        %v1550 = vadd.f32 %v1435, 1.0
        %v1551 = vadd.f32 %v1437, 1.0
        %v1552 = vadd.f32 %v1439, 1.0
        %v1553 = vadd.f32 %v1441, 1.0
        %v1554 = vadd.f32 %v1443, 1.0
        %v1555 = vadd.f32 %v1445, 1.0
        %v1556 = vadd.f32 %v1447, 1.0
        %v1557 = vadd.f32 %v1449, 1.0
        %v1558 = vadd.f32 %v1451, 1.0
        %v1559 = vadd.f32 %v1453, 1.0
        %v1560 = vadd.f32 %v1455, 1.0
        %v1561 = vadd.f32 %v1457, 1.0
        %v1562 = vadd.f32 %v1459, 1.0
        %v1563 = vadd.f32 %v1461, 1.0
        %v1564 = vadd.f32 %v1463, 1.0
        %v1565 = vadd.f32 %v1465, 1.0
        %v1566 = vadd.f32 %v1467, 1.0
        %v1567 = vadd.f32 %v1469, 1.0
        %v1568 = vadd.f32 %v1471, 1.0
        %v1569 = vadd.f32 %v1473, 1.0
        %v1570 = vadd.f32 %v1475, 1.0
        %v1571 = vadd.f32 %v1477, 1.0
        %v1572 = vadd.f32 %v1479, 1.0
        %v1573 = vadd.f32 %v1481, 1.0
        %v1574 = vadd.f32 %v1483, 1.0
        %v1575 = vadd.f32 %v1485, 1.0
        %v1576 = vadd.f32 %v1487, 1.0
        %v1577 = vadd.f32 %v1489, 1.0
        %v1578 = vadd.f32 %v1491, 1.0
        %v1579 = vadd.f32 %v1493, 1.0
        %v1580 = vadd.f32 %v1495, 1.0
        %v1581 = vadd.f32 %v1497, 1.0
        %v1582 = vadd.f32 %v1499, 1.0
        %v1583 = vadd.f32 %v1501, 1.0
        %v1584 = vadd.f32 %v1503, 1.0
        %v1585 = vadd.f32 %v1505, 1.0
        %v1586 = vadd.f32 %v1507, 1.0
        %v1587 = vadd.f32 %v1509, 1.0
        %v1588 = vadd.f32 %v1511, 1.0
        %v1589 = vadd.f32 %v1513, 1.0
        %v1590 = vadd.f32 %v1515, 1.0
        %v1591 = vadd.f32 %v1517, 1.0
        %v1592 = vadd.f32 %v1519, 1.0
        %v1593 = vadd.f32 %v1521, 1.0
        %v1594 = vadd.f32 %v1523, 1.0
        %v1595 = vadd.f32 %v1525, 1.0
        %v1596 = vadd.f32 %v1527, 1.0
        %v1597 = vadd.f32 %v1529, 1.0
        %v1598 = vadd.f32 %v1531, 1.0
        %v1599 = vadd.f32 %v1533, 1.0
        %v1600 = vadd.f32 %v1535, 1.0
        %v1601 = vadd.f32 %v1537, 1.0
        %v1602 = vrcp.pop %v1538
        %v1603 = vmul.f32 1.0, %v1602
        %v1604 = vrcp.pop %v1539
        %v1605 = vmul.f32 1.0, %v1604
        %v1606 = vrcp.pop %v1540
        %v1607 = vmul.f32 1.0, %v1606
        %v1608 = vrcp.pop %v1541
        %v1609 = vmul.f32 1.0, %v1608
        %v1610 = vrcp.pop %v1542
        %v1611 = vmul.f32 1.0, %v1610
        %v1612 = vrcp.pop %v1543
        %v1613 = vmul.f32 1.0, %v1612
        %v1614 = vrcp.pop %v1544
        %v1615 = vmul.f32 1.0, %v1614
        %v1616 = vrcp.pop %v1545
        %v1617 = vmul.f32 1.0, %v1616
        %v1618 = vrcp.pop %v1546
        %v1619 = vmul.f32 1.0, %v1618
        %v1620 = vrcp.pop %v1547
        %v1621 = vmul.f32 1.0, %v1620
        %v1622 = vrcp.pop %v1548
        %v1623 = vmul.f32 1.0, %v1622
        %v1624 = vrcp.pop %v1549
        %v1625 = vmul.f32 1.0, %v1624
        %v1626 = vrcp.pop %v1550
        %v1627 = vmul.f32 1.0, %v1626
        %v1628 = vrcp.pop %v1551
        %v1629 = vmul.f32 1.0, %v1628
        %v1630 = vrcp.pop %v1552
        %v1631 = vmul.f32 1.0, %v1630
        %v1632 = vrcp.pop %v1553
        %v1633 = vmul.f32 1.0, %v1632
        %v1634 = vrcp.pop %v1554
        %v1635 = vmul.f32 1.0, %v1634
        %v1636 = vrcp.pop %v1555
        %v1637 = vmul.f32 1.0, %v1636
        %v1638 = vrcp.pop %v1556
        %v1639 = vmul.f32 1.0, %v1638
        %v1640 = vrcp.pop %v1557
        %v1641 = vmul.f32 1.0, %v1640
        %v1642 = vrcp.pop %v1558
        %v1643 = vmul.f32 1.0, %v1642
        %v1644 = vrcp.pop %v1559
        %v1645 = vmul.f32 1.0, %v1644
        %v1646 = vrcp.pop %v1560
        %v1647 = vmul.f32 1.0, %v1646
        %v1648 = vrcp.pop %v1561
        %v1649 = vmul.f32 1.0, %v1648
        %v1650 = vrcp.pop %v1562
        %v1651 = vmul.f32 1.0, %v1650
        %v1652 = vrcp.pop %v1563
        %v1653 = vmul.f32 1.0, %v1652
        %v1654 = vrcp.pop %v1564
        %v1655 = vmul.f32 1.0, %v1654
        %v1656 = vrcp.pop %v1565
        %v1657 = vmul.f32 1.0, %v1656
        %v1658 = vrcp.pop %v1566
        %v1659 = vmul.f32 1.0, %v1658
        %v1660 = vrcp.pop %v1567
        %v1661 = vmul.f32 1.0, %v1660
        %v1662 = vrcp.pop %v1568
        %v1663 = vmul.f32 1.0, %v1662
        %v1664 = vrcp.pop %v1569
        %v1665 = vmul.f32 1.0, %v1664
        %v1666 = vrcp.pop %v1570
        %v1667 = vmul.f32 1.0, %v1666
        %v1668 = vrcp.pop %v1571
        %v1669 = vmul.f32 1.0, %v1668
        %v1670 = vrcp.pop %v1572
        %v1671 = vmul.f32 1.0, %v1670
        %v1672 = vrcp.pop %v1573
        %v1673 = vmul.f32 1.0, %v1672
        %v1674 = vrcp.pop %v1574
        %v1675 = vmul.f32 1.0, %v1674
        %v1676 = vrcp.pop %v1575
        %v1677 = vmul.f32 1.0, %v1676
        %v1678 = vrcp.pop %v1576
        %v1679 = vmul.f32 1.0, %v1678
        %v1680 = vrcp.pop %v1577
        %v1681 = vmul.f32 1.0, %v1680
        %v1682 = vrcp.pop %v1578
        %v1683 = vmul.f32 1.0, %v1682
        %v1684 = vrcp.pop %v1579
        %v1685 = vmul.f32 1.0, %v1684
        %v1686 = vrcp.pop %v1580
        %v1687 = vmul.f32 1.0, %v1686
        %v1688 = vrcp.pop %v1581
        %v1689 = vmul.f32 1.0, %v1688
        %v1690 = vrcp.pop %v1582
        %v1691 = vmul.f32 1.0, %v1690
        %v1692 = vrcp.pop %v1583
        %v1693 = vmul.f32 1.0, %v1692
        %v1694 = vrcp.pop %v1584
        %v1695 = vmul.f32 1.0, %v1694
        %v1696 = vrcp.pop %v1585
        %v1697 = vmul.f32 1.0, %v1696
        %v1698 = vrcp.pop %v1586
        %v1699 = vmul.f32 1.0, %v1698
        %v1700 = vrcp.pop %v1587
        %v1701 = vmul.f32 1.0, %v1700
        %v1702 = vrcp.pop %v1588
        %v1703 = vmul.f32 1.0, %v1702
        %v1704 = vrcp.pop %v1589
        %v1705 = vmul.f32 1.0, %v1704
        %v1706 = vrcp.pop %v1590
        %v1707 = vmul.f32 1.0, %v1706
        %v1708 = vrcp.pop %v1591
        %v1709 = vmul.f32 1.0, %v1708
        %v1710 = vrcp.pop %v1592
        %v1711 = vmul.f32 1.0, %v1710
        %v1712 = vrcp.pop %v1593
        %v1713 = vmul.f32 1.0, %v1712
        %v1714 = vrcp.pop %v1594
        %v1715 = vmul.f32 1.0, %v1714
        %v1716 = vrcp.pop %v1595
        %v1717 = vmul.f32 1.0, %v1716
        %v1718 = vrcp.pop %v1596
        %v1719 = vmul.f32 1.0, %v1718
        %v1720 = vrcp.pop %v1597
        %v1721 = vmul.f32 1.0, %v1720
        %v1722 = vrcp.pop %v1598
        %v1723 = vmul.f32 1.0, %v1722
        %v1724 = vrcp.pop %v1599
        %v1725 = vmul.f32 1.0, %v1724
        %v1726 = vrcp.pop %v1600
        %v1727 = vmul.f32 1.0, %v1726
        %v1728 = vrcp.pop %v1601
        %v1729 = vmul.f32 1.0, %v1728
        %vm1730 = vcmask 7168
        %1731 = vst.msk [vmem:[%s261] sm:$0xff] %vm1730, %v1603
        %1732 = vst.msk [vmem:[%s261 + $0x8] sm:$0xff] %vm1730, %v1605
        %1733 = vst.msk [vmem:[%s261 + $0x10] sm:$0xff] %vm1730, %v1607
        %1734 = vst.msk [vmem:[%s261 + $0x18] sm:$0xff] %vm1730, %v1609
        %1735 = vst.msk [vmem:[%s261 + $0x20] sm:$0xff] %vm1730, %v1611
        %1736 = vst.msk [vmem:[%s261 + $0x28] sm:$0xff] %vm1730, %v1613
        %1737 = vst.msk [vmem:[%s261 + $0x30] sm:$0xff] %vm1730, %v1615
        %1738 = vst.msk [vmem:[%s261 + $0x38] sm:$0xff] %vm1730, %v1617
        %1739 = vst.msk [vmem:[%s261 + $0x40] sm:$0xff] %vm1730, %v1619
        %1740 = vst.msk [vmem:[%s261 + $0x48] sm:$0xff] %vm1730, %v1621
        %1741 = vst.msk [vmem:[%s261 + $0x50] sm:$0xff] %vm1730, %v1623
        %1742 = vst.msk [vmem:[%s261 + $0x58] sm:$0xff] %vm1730, %v1625
        %1743 = vst.msk [vmem:[%s261 + $0x60] sm:$0xff] %vm1730, %v1627
        %1744 = vst.msk [vmem:[%s261 + $0x68] sm:$0xff] %vm1730, %v1629
        %1745 = vst.msk [vmem:[%s261 + $0x70] sm:$0xff] %vm1730, %v1631
        %1746 = vst.msk [vmem:[%s261 + $0x78] sm:$0xff] %vm1730, %v1633
        %1747 = vst.msk [vmem:[%s261 + $0x80] sm:$0xff] %vm1730, %v1635
        %1748 = vst.msk [vmem:[%s261 + $0x88] sm:$0xff] %vm1730, %v1637
        %1749 = vst.msk [vmem:[%s261 + $0x90] sm:$0xff] %vm1730, %v1639
        %1750 = vst.msk [vmem:[%s261 + $0x98] sm:$0xff] %vm1730, %v1641
        %1751 = vst.msk [vmem:[%s261 + $0xa0] sm:$0xff] %vm1730, %v1643
        %1752 = vst.msk [vmem:[%s261 + $0xa8] sm:$0xff] %vm1730, %v1645
        %1753 = vst.msk [vmem:[%s261 + $0xb0] sm:$0xff] %vm1730, %v1647
        %1754 = vst.msk [vmem:[%s261 + $0xb8] sm:$0xff] %vm1730, %v1649
        %1755 = vst.msk [vmem:[%s261 + $0xc0] sm:$0xff] %vm1730, %v1651
        %1756 = vst.msk [vmem:[%s261 + $0xc8] sm:$0xff] %vm1730, %v1653
        %1757 = vst.msk [vmem:[%s261 + $0xd0] sm:$0xff] %vm1730, %v1655
        %1758 = vst.msk [vmem:[%s261 + $0xd8] sm:$0xff] %vm1730, %v1657
        %1759 = vst.msk [vmem:[%s261 + $0xe0] sm:$0xff] %vm1730, %v1659
        %1760 = vst.msk [vmem:[%s261 + $0xe8] sm:$0xff] %vm1730, %v1661
        %1761 = vst.msk [vmem:[%s261 + $0xf0] sm:$0xff] %vm1730, %v1663
        %1762 = vst.msk [vmem:[%s261 + $0xf8] sm:$0xff] %vm1730, %v1665
        %1763 = vst.msk [vmem:[%s261 + $0x100] sm:$0xff] %vm1730, %v1667
        %1764 = vst.msk [vmem:[%s261 + $0x108] sm:$0xff] %vm1730, %v1669
        %1765 = vst.msk [vmem:[%s261 + $0x110] sm:$0xff] %vm1730, %v1671
        %1766 = vst.msk [vmem:[%s261 + $0x118] sm:$0xff] %vm1730, %v1673
        %1767 = vst.msk [vmem:[%s261 + $0x120] sm:$0xff] %vm1730, %v1675
        %1768 = vst.msk [vmem:[%s261 + $0x128] sm:$0xff] %vm1730, %v1677
        %1769 = vst.msk [vmem:[%s261 + $0x130] sm:$0xff] %vm1730, %v1679
        %1770 = vst.msk [vmem:[%s261 + $0x138] sm:$0xff] %vm1730, %v1681
        %1771 = vst.msk [vmem:[%s261 + $0x140] sm:$0xff] %vm1730, %v1683
        %1772 = vst.msk [vmem:[%s261 + $0x148] sm:$0xff] %vm1730, %v1685
        %1773 = vst.msk [vmem:[%s261 + $0x150] sm:$0xff] %vm1730, %v1687
        %1774 = vst.msk [vmem:[%s261 + $0x158] sm:$0xff] %vm1730, %v1689
        %1775 = vst.msk [vmem:[%s261 + $0x160] sm:$0xff] %vm1730, %v1691
        %1776 = vst.msk [vmem:[%s261 + $0x168] sm:$0xff] %vm1730, %v1693
        %1777 = vst.msk [vmem:[%s261 + $0x170] sm:$0xff] %vm1730, %v1695
        %1778 = vst.msk [vmem:[%s261 + $0x178] sm:$0xff] %vm1730, %v1697
        %1779 = vst.msk [vmem:[%s261 + $0x180] sm:$0xff] %vm1730, %v1699
        %1780 = vst.msk [vmem:[%s261 + $0x188] sm:$0xff] %vm1730, %v1701
        %1781 = vst.msk [vmem:[%s261 + $0x190] sm:$0xff] %vm1730, %v1703
        %1782 = vst.msk [vmem:[%s261 + $0x198] sm:$0xff] %vm1730, %v1705
        %1783 = vst.msk [vmem:[%s261 + $0x1a0] sm:$0xff] %vm1730, %v1707
        %1784 = vst.msk [vmem:[%s261 + $0x1a8] sm:$0xff] %vm1730, %v1709
        %1785 = vst.msk [vmem:[%s261 + $0x1b0] sm:$0xff] %vm1730, %v1711
        %1786 = vst.msk [vmem:[%s261 + $0x1b8] sm:$0xff] %vm1730, %v1713
        %1787 = vst.msk [vmem:[%s261 + $0x1c0] sm:$0xff] %vm1730, %v1715
        %1788 = vst.msk [vmem:[%s261 + $0x1c8] sm:$0xff] %vm1730, %v1717
        %1789 = vst.msk [vmem:[%s261 + $0x1d0] sm:$0xff] %vm1730, %v1719
        %1790 = vst.msk [vmem:[%s261 + $0x1d8] sm:$0xff] %vm1730, %v1721
        %1791 = vst.msk [vmem:[%s261 + $0x1e0] sm:$0xff] %vm1730, %v1723
        %1792 = vst.msk [vmem:[%s261 + $0x1e8] sm:$0xff] %vm1730, %v1725
        %1793 = vst.msk [vmem:[%s261 + $0x1f0] sm:$0xff] %vm1730, %v1727
        %1794 = vst.msk [vmem:[%s261 + $0x1f8] sm:$0xff] %vm1730, %v1729
        %s1795 = smul.u32 64, %s21
        %p1796 = scmp.lt.s32.totalorder %s1795, 127
        %s1797 = scalar_select %p1796, %s1795, 127
        %s1798 = smul.addr %s1797, 8
        %s1799 = scalar_lea.vmem %s5, %s1798
        // Predicated region
        $region49: #{tpu_custom_call.1} parent=39 // pred_check
          %p1800 = pneg %p149
        $region50: #{tpu_custom_call.1} parent=39 // pred_check_branch
          %1802 = sbr.rel (%p1800) target = $region52
        $region51: #{tpu_custom_call.1} parent=39 // pred_region
          %s1803 = smul.u32 64, %s21
        $region52: #{tpu_custom_call.1} parent=39 // pred_fallthru
          _
      $region40: #{tpu_custom_call.1} parent=5 // pred_fallthru
        _
      %p1804 = scmp.le.s32.totalorder 2, %s16
      // Predicated region
      $region53: #{tpu_custom_call.1} parent=5 // pred_check
        %p1805 = pneg %p1804
      $region54: #{tpu_custom_call.1} parent=5 // pred_check_branch
        %1807 = sbr.rel (%p1805) target = $region56
      $region55: #{tpu_custom_call.1} parent=5 // pred_region
        %s1808 = ssub.s32 %s16, 2
        // Predicated region
        $region57: #{tpu_custom_call.1} parent=55 // pred_check
          %p1809 = pneg %p155
        $region58: #{tpu_custom_call.1} parent=55 // pred_check_branch
          %1811 = sbr.rel (%p1809) target = $region60
        $region59: #{tpu_custom_call.1} parent=55 // pred_region
          %s1812 = smul.u32 64, %s22
          %p1813 = scmp.lt.s32.totalorder %s1812, 127
          %s1814 = scalar_select %p1813, %s1812, 127
          %s1815 = smul.addr %s1814, 8
          %s1816 = scalar_lea.vmem %s5, %s1815
        $region60: #{tpu_custom_call.1} parent=55 // pred_fallthru
          _
      $region56: #{tpu_custom_call.1} parent=5 // pred_fallthru
        _
    $region6: #{tpu_custom_call.1} parent=1 // loop_footer
      %s20 = sadd.s32 1, %s16
    $region7: #{tpu_custom_call.1} parent=1 // loop_footer_branch
      %15 = sbr.rel target = $region3
    $region8: #{tpu_custom_call.1} parent=1 // loop_exit
      _
    %1817 = vsyncpa [#allocation4], 1
    %s1818 = scalar_lea.sflag [#allocation4], 1
    %1819 = vsyncpa %s1818, 1
    %1820 = vsyncpa [#allocation6], 1

</llo_original>
